<compile_context>
chip_gen: v5e
topology: v5e:2x2
jax: 0.10.0
libtpu: 0.0.40
codegen_flags: <defaults>
</compile_context>

<pallas_src>
import jax
import jax.numpy as jnp
from jax import lax
from jax.experimental import pallas as pl
from jax.experimental.pallas import tpu as pltpu


def lstm_kernel(x_ref, w_ih_ref, w_hh_ref, b_ref, w_out_ref, b_out_ref,
                out_ref, xproj_ref):
    """Full-sequence LSTM recurrence + final linear head (all in VMEM).

    x_ref:     (S, Bp, 1)      time-major input (I == 1), f32
    w_ih_ref:  (1, 4*Hp)       input->gates weights, gate order (i,f,o,g), f32
    w_hh_ref:  (Hp, 4*Hp)      hidden->gates weights, gate order (i,f,o,g), bf16
    b_ref:     (1, 4*Hp)       combined bias (b_ih + b_hh), padded, f32
    w_out_ref: (Hp, Op)        linear head weights, row/lane-padded, f32
    b_out_ref: (1, Op)         linear head bias, lane-padded, f32
    out_ref:   (Bp, Op)        predictions from the last time step, f32
    xproj_ref: (S, Bp, 4*Hp)   VMEM scratch: hoisted input projection + bias
    """
    S, Bp, _ = x_ref.shape
    Hp = w_hh_ref.shape[0]

    # ---- hoisted input projection (I == 1 -> rank-1 broadcast, no matmul) ----
    # (S, Bp, 1) * (1, 4Hp) + (1, 4Hp)  ->  (S, Bp, 4Hp)
    xproj_ref[...] = x_ref[...] * w_ih_ref[...] + b_ref[...]

    w_hh = w_hh_ref[...]            # bf16, loaded once, reused every step

    def step(t, carry):
        h, c = carry                # f32 state
        # bf16 x bf16 -> f32 accumulate on the MXU (native path on all gens).
        gates = xproj_ref[t] + jnp.dot(h.astype(jnp.bfloat16), w_hh,
                                       preferred_element_type=jnp.float32)
        # Gate order (i, f, o, g): one fused sigmoid pass over the first 3*Hp
        # lanes (single EUP tanh issue span), one tanh over the last Hp block.
        sig_gates = 0.5 * jnp.tanh(0.5 * gates[:, :3 * Hp]) + 0.5
        i_g = sig_gates[:, 0 * Hp:1 * Hp]
        f_g = sig_gates[:, 1 * Hp:2 * Hp]
        o_g = sig_gates[:, 2 * Hp:3 * Hp]
        g_g = jnp.tanh(gates[:, 3 * Hp:4 * Hp])
        c_new = f_g * c + i_g * g_g
        h_new = o_g * jnp.tanh(c_new)
        return (h_new, c_new)

    h0 = jnp.zeros((Bp, Hp), jnp.float32)
    c0 = jnp.zeros((Bp, Hp), jnp.float32)
    # S is a small static trip count -> fully unroll for scheduler visibility.
    h_last, _ = lax.fori_loop(0, S, step, (h0, c0), unroll=True)

    # Lane/sublane-dense head: (Bp, Hp) @ (Hp, Op) -> full (8, 128) store.
    out_ref[...] = (jnp.dot(h_last, w_out_ref[...],
                            preferred_element_type=jnp.float32)
                    + b_out_ref[...])


def _pad_gate_cols(w_t, H, Hp):
    """(rows, 4H) PyTorch gate order (i,f,g,o) -> (rows, 4Hp) kernel order (i,f,o,g)."""
    rows = w_t.shape[0]
    out = jnp.zeros((rows, 4 * Hp), jnp.float32)
    dst = (0, 1, 3, 2)   # source gate k (i,f,g,o) -> destination block (i,f,o,g)
    for k in range(4):
        out = out.at[:, dst[k] * Hp:dst[k] * Hp + H].set(w_t[:, k * H:(k + 1) * H])
    return out


def lstm_model_forward(x, params, hp=128, op=128):
    """x: (B, S, I) batch-first, like the PyTorch module. Returns (B, O)."""
    w_ih, w_hh, b_ih, b_hh, w_out, b_out = params
    B, S, I = x.shape
    H = w_hh.shape[1]
    O = w_out.shape[0]
    assert I == 1, "kernel specialises the module's input_size=1"
    Hp = max(hp, H)
    Op = max(op, O)
    Bp = max(8, ((B + 7) // 8) * 8)     # sublane-pad the batch to a multiple of 8

    # Time-major, batch-padded input: (S, Bp, 1).
    x_tm = jnp.transpose(x, (1, 0, 2)).astype(jnp.float32)
    x_tm = jnp.zeros((S, Bp, I), jnp.float32).at[:, :B, :].set(x_tm)

    w_ih_p = _pad_gate_cols(w_ih.T.astype(jnp.float32), H, Hp)       # (1, 4Hp)
    w_hh_p = _pad_gate_cols(w_hh.T.astype(jnp.float32), H, Hp)       # (H, 4Hp)
    w_hh_p = jnp.zeros((Hp, 4 * Hp), jnp.float32).at[:H, :].set(w_hh_p)
    w_hh_p = w_hh_p.astype(jnp.bfloat16)                             # bf16 MXU operand
    bias_p = _pad_gate_cols((b_ih + b_hh).reshape(1, 4 * H)
                            .astype(jnp.float32), H, Hp)             # (1, 4Hp)
    w_out_p = jnp.zeros((Hp, Op), jnp.float32).at[:H, :O].set(
        w_out.T.astype(jnp.float32))                                 # (Hp, Op)
    b_out_p = jnp.zeros((1, Op), jnp.float32).at[:, :O].set(
        b_out.reshape(1, O).astype(jnp.float32))                     # (1, Op)

    out_padded = pl.pallas_call(
        lstm_kernel,
        out_shape=jax.ShapeDtypeStruct((Bp, Op), jnp.float32),
        in_specs=[pl.BlockSpec(memory_space=pltpu.MemorySpace.VMEM)] * 6,
        out_specs=pl.BlockSpec(memory_space=pltpu.MemorySpace.VMEM),
        scratch_shapes=[pltpu.VMEM((S, Bp, 4 * Hp), jnp.float32)],
    )(x_tm, w_ih_p, w_hh_p, bias_p, w_out_p, b_out_p)

    return out_padded[:B, :O]


def reference_forward(x, params):
    """Pure-JAX f32 reference matching PyTorch nn.LSTM + nn.Linear semantics."""
    w_ih, w_hh, b_ih, b_hh, w_out, b_out = params
    B, S, I = x.shape
    H = w_hh.shape[1]

    def step(carry, x_t):
        h, c = carry
        gates = x_t @ w_ih.T + b_ih + h @ w_hh.T + b_hh
        i_g = jax.nn.sigmoid(gates[:, 0 * H:1 * H])
        f_g = jax.nn.sigmoid(gates[:, 1 * H:2 * H])
        g_g = jnp.tanh(gates[:, 2 * H:3 * H])
        o_g = jax.nn.sigmoid(gates[:, 3 * H:4 * H])
        c_new = f_g * c + i_g * g_g
        h_new = o_g * jnp.tanh(c_new)
        return (h_new, c_new), None

    h0 = jnp.zeros((B, H), jnp.float32)
    c0 = jnp.zeros((B, H), jnp.float32)
    (h_last, _), _ = lax.scan(step, (h0, c0), jnp.transpose(x, (1, 0, 2)))
    return h_last @ w_out.T + b_out


if __name__ == "__main__":
    B, S, I, H, O = 4, 8, 1, 64, 1

    key = jax.random.PRNGKey(0)
    k_wih, k_whh, k_bih, k_bhh, k_wo, k_bo, k_x = jax.random.split(key, 7)

    # PyTorch-style uniform(-1/sqrt(H), 1/sqrt(H)) init, deterministic.
    bound = 1.0 / jnp.sqrt(jnp.float32(H))
    w_ih = jax.random.uniform(k_wih, (4 * H, I), jnp.float32, -bound, bound)
    w_hh = jax.random.uniform(k_whh, (4 * H, H), jnp.float32, -bound, bound)
    b_ih = jax.random.uniform(k_bih, (4 * H,), jnp.float32, -bound, bound)
    b_hh = jax.random.uniform(k_bhh, (4 * H,), jnp.float32, -bound, bound)
    w_out = jax.random.uniform(k_wo, (O, H), jnp.float32, -bound, bound)
    b_out = jax.random.uniform(k_bo, (O,), jnp.float32, -bound, bound)
    params = (w_ih, w_hh, b_ih, b_hh, w_out, b_out)

    x = jax.random.normal(k_x, (B, S, I), jnp.float32)

    out = jax.block_until_ready(lstm_model_forward(x, params))
    ref = jax.block_until_ready(reference_forward(x, params))

    assert out.shape == (B, O)
    # Tolerance loosened vs. the pure-f32 version: the recurrent matmul now
    # runs with bf16 operands (f32 accumulation), which rounds h/w_hh to ~8
    # mantissa bits each step; observed error is ~1e-3 on these magnitudes.
    assert jnp.allclose(out, ref, atol=2e-2, rtol=2e-2), (out, ref)

    print("KERNEL_OK")
</pallas_src>

<mosaic_0001>
module attributes {stable_mosaic.version = 11 : i64} {
  func.func @lstm_kernel(%arg0: memref<8x8x1xf32, #tpu.memory_space<vmem>>, %arg1: memref<1x512xf32, #tpu.memory_space<vmem>>, %arg2: memref<128x512xbf16, #tpu.memory_space<vmem>>, %arg3: memref<1x512xf32, #tpu.memory_space<vmem>>, %arg4: memref<128x128xf32, #tpu.memory_space<vmem>>, %arg5: memref<1x128xf32, #tpu.memory_space<vmem>>, %arg6: memref<8x128xf32, #tpu.memory_space<vmem>>, %arg7: memref<8x8x512xf32, #tpu.memory_space<vmem>>) attributes {dimension_semantics = [], scalar_prefetch = 0 : i64, scratch_operands = 1 : i64, tpu.core_type = #tpu.core_type<tc>} {
    %c0 = arith.constant 0 : index
    %c0_0 = arith.constant 0 : index
    %c0_1 = arith.constant 0 : index
    %0 = vector.load %arg0[%c0, %c0_0, %c0_1] : memref<8x8x1xf32, #tpu.memory_space<vmem>>, vector<8x8x1xf32>
    %c0_2 = arith.constant 0 : index
    %c0_3 = arith.constant 0 : index
    %1 = vector.load %arg1[%c0_2, %c0_3] : memref<1x512xf32, #tpu.memory_space<vmem>>, vector<1x512xf32>
    %2 = vector.shape_cast %1 : vector<1x512xf32> to vector<1x1x512xf32>
    %3 = vector.broadcast %0 : vector<8x8x1xf32> to vector<8x8x512xf32>
    %4 = vector.broadcast %2 : vector<1x1x512xf32> to vector<8x8x512xf32>
    %5 = arith.mulf %3, %4 : vector<8x8x512xf32>
    %c0_4 = arith.constant 0 : index
    %c0_5 = arith.constant 0 : index
    %6 = vector.load %arg3[%c0_4, %c0_5] : memref<1x512xf32, #tpu.memory_space<vmem>>, vector<1x512xf32>
    %7 = vector.shape_cast %6 : vector<1x512xf32> to vector<1x1x512xf32>
    %8 = vector.broadcast %7 : vector<1x1x512xf32> to vector<8x8x512xf32>
    %9 = arith.addf %5, %8 : vector<8x8x512xf32>
    %c0_6 = arith.constant 0 : index
    %c0_7 = arith.constant 0 : index
    %c0_8 = arith.constant 0 : index
    %10 = vector.load %arg7[%c0_6, %c0_7, %c0_8] : memref<8x8x512xf32, #tpu.memory_space<vmem>>, vector<8x8x512xf32>
    tpu.vector_store %arg7[%c0_6, %c0_7, %c0_8], %9 {strides = array<i32>} : memref<8x8x512xf32, #tpu.memory_space<vmem>>, vector<8x8x512xf32>,
    %c0_9 = arith.constant 0 : index
    %c0_10 = arith.constant 0 : index
    %11 = vector.load %arg2[%c0_9, %c0_10] : memref<128x512xbf16, #tpu.memory_space<vmem>>, vector<128x512xbf16>
    %cst = arith.constant 0.000000e+00 : f32
    %12 = vector.broadcast %cst : f32 to vector<8x128xf32>
    %cst_11 = arith.constant 0.000000e+00 : f32
    %13 = vector.broadcast %cst_11 : f32 to vector<8x128xf32>
    %c0_i32 = arith.constant 0 : i32
    %14 = arith.index_cast %c0_i32 : i32 to index
    %c0_12 = arith.constant 0 : index
    %c0_13 = arith.constant 0 : index
    %15 = vector.load %arg7[%14, %c0_12, %c0_13] : memref<8x8x512xf32, #tpu.memory_space<vmem>>, vector<1x8x512xf32>
    %16 = vector.shape_cast %15 : vector<1x8x512xf32> to vector<8x512xf32>
    %17 = arith.truncf %12 : vector<8x128xf32> to vector<8x128xbf16>
    %cst_14 = arith.constant dense<0.000000e+00> : vector<8x512xf32>
    %18 = tpu.matmul %17, %11, %cst_14 {dimension_numbers = #tpu.dot_dimension_numbers<[1], [0], [0], [1], [0, 0, 1, 1], [], []>} : vector<8x128xbf16>, vector<128x512xbf16>, vector<8x512xf32> -> vector<8x512xf32>
    %19 = arith.addf %16, %18 : vector<8x512xf32>
    %20 = vector.extract_strided_slice %19 {offsets = [0, 0], sizes = [8, 384], strides = [1, 1]} : vector<8x512xf32> to vector<8x384xf32>
    %cst_15 = arith.constant 5.000000e-01 : f32
    %21 = vector.broadcast %cst_15 : f32 to vector<8x384xf32>
    %22 = arith.mulf %21, %20 : vector<8x384xf32>
    %23 = math.tanh %22 : vector<8x384xf32>
    %cst_16 = arith.constant 5.000000e-01 : f32
    %24 = vector.broadcast %cst_16 : f32 to vector<8x384xf32>
    %25 = arith.mulf %24, %23 : vector<8x384xf32>
    %cst_17 = arith.constant 5.000000e-01 : f32
    %26 = vector.broadcast %cst_17 : f32 to vector<8x384xf32>
    %27 = arith.addf %25, %26 : vector<8x384xf32>
    %28 = vector.extract_strided_slice %27 {offsets = [0, 0], sizes = [8, 128], strides = [1, 1]} : vector<8x384xf32> to vector<8x128xf32>
    %29 = vector.extract_strided_slice %27 {offsets = [0, 128], sizes = [8, 128], strides = [1, 1]} : vector<8x384xf32> to vector<8x128xf32>
    %30 = vector.extract_strided_slice %27 {offsets = [0, 256], sizes = [8, 128], strides = [1, 1]} : vector<8x384xf32> to vector<8x128xf32>
    %31 = vector.extract_strided_slice %19 {offsets = [0, 384], sizes = [8, 128], strides = [1, 1]} : vector<8x512xf32> to vector<8x128xf32>
    %32 = math.tanh %31 : vector<8x128xf32>
    %33 = arith.mulf %29, %13 : vector<8x128xf32>
    %34 = arith.mulf %28, %32 : vector<8x128xf32>
    %35 = arith.addf %33, %34 : vector<8x128xf32>
    %36 = math.tanh %35 : vector<8x128xf32>
    %37 = arith.mulf %30, %36 : vector<8x128xf32>
    %c1_i32 = arith.constant 1 : i32
    %38 = arith.index_cast %c1_i32 : i32 to index
    %c0_18 = arith.constant 0 : index
    %c0_19 = arith.constant 0 : index
    %39 = vector.load %arg7[%38, %c0_18, %c0_19] : memref<8x8x512xf32, #tpu.memory_space<vmem>>, vector<1x8x512xf32>
    %40 = vector.shape_cast %39 : vector<1x8x512xf32> to vector<8x512xf32>
    %41 = arith.truncf %37 : vector<8x128xf32> to vector<8x128xbf16>
    %cst_20 = arith.constant dense<0.000000e+00> : vector<8x512xf32>
    %42 = tpu.matmul %41, %11, %cst_20 {dimension_numbers = #tpu.dot_dimension_numbers<[1], [0], [0], [1], [0, 0, 1, 1], [], []>} : vector<8x128xbf16>, vector<128x512xbf16>, vector<8x512xf32> -> vector<8x512xf32>
    %43 = arith.addf %40, %42 : vector<8x512xf32>
    %44 = vector.extract_strided_slice %43 {offsets = [0, 0], sizes = [8, 384], strides = [1, 1]} : vector<8x512xf32> to vector<8x384xf32>
    %cst_21 = arith.constant 5.000000e-01 : f32
    %45 = vector.broadcast %cst_21 : f32 to vector<8x384xf32>
    %46 = arith.mulf %45, %44 : vector<8x384xf32>
    %47 = math.tanh %46 : vector<8x384xf32>
    %cst_22 = arith.constant 5.000000e-01 : f32
    %48 = vector.broadcast %cst_22 : f32 to vector<8x384xf32>
    %49 = arith.mulf %48, %47 : vector<8x384xf32>
    %cst_23 = arith.constant 5.000000e-01 : f32
    %50 = vector.broadcast %cst_23 : f32 to vector<8x384xf32>
    %51 = arith.addf %49, %50 : vector<8x384xf32>
    %52 = vector.extract_strided_slice %51 {offsets = [0, 0], sizes = [8, 128], strides = [1, 1]} : vector<8x384xf32> to vector<8x128xf32>
    %53 = vector.extract_strided_slice %51 {offsets = [0, 128], sizes = [8, 128], strides = [1, 1]} : vector<8x384xf32> to vector<8x128xf32>
    %54 = vector.extract_strided_slice %51 {offsets = [0, 256], sizes = [8, 128], strides = [1, 1]} : vector<8x384xf32> to vector<8x128xf32>
    %55 = vector.extract_strided_slice %43 {offsets = [0, 384], sizes = [8, 128], strides = [1, 1]} : vector<8x512xf32> to vector<8x128xf32>
    %56 = math.tanh %55 : vector<8x128xf32>
    %57 = arith.mulf %53, %35 : vector<8x128xf32>
    %58 = arith.mulf %52, %56 : vector<8x128xf32>
    %59 = arith.addf %57, %58 : vector<8x128xf32>
    %60 = math.tanh %59 : vector<8x128xf32>
    %61 = arith.mulf %54, %60 : vector<8x128xf32>
    %c2_i32 = arith.constant 2 : i32
    %62 = arith.index_cast %c2_i32 : i32 to index
    %c0_24 = arith.constant 0 : index
    %c0_25 = arith.constant 0 : index
    %63 = vector.load %arg7[%62, %c0_24, %c0_25] : memref<8x8x512xf32, #tpu.memory_space<vmem>>, vector<1x8x512xf32>
    %64 = vector.shape_cast %63 : vector<1x8x512xf32> to vector<8x512xf32>
    %65 = arith.truncf %61 : vector<8x128xf32> to vector<8x128xbf16>
    %cst_26 = arith.constant dense<0.000000e+00> : vector<8x512xf32>
    %66 = tpu.matmul %65, %11, %cst_26 {dimension_numbers = #tpu.dot_dimension_numbers<[1], [0], [0], [1], [0, 0, 1, 1], [], []>} : vector<8x128xbf16>, vector<128x512xbf16>, vector<8x512xf32> -> vector<8x512xf32>
    %67 = arith.addf %64, %66 : vector<8x512xf32>
    %68 = vector.extract_strided_slice %67 {offsets = [0, 0], sizes = [8, 384], strides = [1, 1]} : vector<8x512xf32> to vector<8x384xf32>
    %cst_27 = arith.constant 5.000000e-01 : f32
    %69 = vector.broadcast %cst_27 : f32 to vector<8x384xf32>
    %70 = arith.mulf %69, %68 : vector<8x384xf32>
    %71 = math.tanh %70 : vector<8x384xf32>
    %cst_28 = arith.constant 5.000000e-01 : f32
    %72 = vector.broadcast %cst_28 : f32 to vector<8x384xf32>
    %73 = arith.mulf %72, %71 : vector<8x384xf32>
    %cst_29 = arith.constant 5.000000e-01 : f32
    %74 = vector.broadcast %cst_29 : f32 to vector<8x384xf32>
    %75 = arith.addf %73, %74 : vector<8x384xf32>
    %76 = vector.extract_strided_slice %75 {offsets = [0, 0], sizes = [8, 128], strides = [1, 1]} : vector<8x384xf32> to vector<8x128xf32>
    %77 = vector.extract_strided_slice %75 {offsets = [0, 128], sizes = [8, 128], strides = [1, 1]} : vector<8x384xf32> to vector<8x128xf32>
    %78 = vector.extract_strided_slice %75 {offsets = [0, 256], sizes = [8, 128], strides = [1, 1]} : vector<8x384xf32> to vector<8x128xf32>
    %79 = vector.extract_strided_slice %67 {offsets = [0, 384], sizes = [8, 128], strides = [1, 1]} : vector<8x512xf32> to vector<8x128xf32>
    %80 = math.tanh %79 : vector<8x128xf32>
    %81 = arith.mulf %77, %59 : vector<8x128xf32>
    %82 = arith.mulf %76, %80 : vector<8x128xf32>
    %83 = arith.addf %81, %82 : vector<8x128xf32>
    %84 = math.tanh %83 : vector<8x128xf32>
    %85 = arith.mulf %78, %84 : vector<8x128xf32>
    %c3_i32 = arith.constant 3 : i32
    %86 = arith.index_cast %c3_i32 : i32 to index
    %c0_30 = arith.constant 0 : index
    %c0_31 = arith.constant 0 : index
    %87 = vector.load %arg7[%86, %c0_30, %c0_31] : memref<8x8x512xf32, #tpu.memory_space<vmem>>, vector<1x8x512xf32>
    %88 = vector.shape_cast %87 : vector<1x8x512xf32> to vector<8x512xf32>
    %89 = arith.truncf %85 : vector<8x128xf32> to vector<8x128xbf16>
    %cst_32 = arith.constant dense<0.000000e+00> : vector<8x512xf32>
    %90 = tpu.matmul %89, %11, %cst_32 {dimension_numbers = #tpu.dot_dimension_numbers<[1], [0], [0], [1], [0, 0, 1, 1], [], []>} : vector<8x128xbf16>, vector<128x512xbf16>, vector<8x512xf32> -> vector<8x512xf32>
    %91 = arith.addf %88, %90 : vector<8x512xf32>
    %92 = vector.extract_strided_slice %91 {offsets = [0, 0], sizes = [8, 384], strides = [1, 1]} : vector<8x512xf32> to vector<8x384xf32>
    %cst_33 = arith.constant 5.000000e-01 : f32
    %93 = vector.broadcast %cst_33 : f32 to vector<8x384xf32>
    %94 = arith.mulf %93, %92 : vector<8x384xf32>
    %95 = math.tanh %94 : vector<8x384xf32>
    %cst_34 = arith.constant 5.000000e-01 : f32
    %96 = vector.broadcast %cst_34 : f32 to vector<8x384xf32>
    %97 = arith.mulf %96, %95 : vector<8x384xf32>
    %cst_35 = arith.constant 5.000000e-01 : f32
    %98 = vector.broadcast %cst_35 : f32 to vector<8x384xf32>
    %99 = arith.addf %97, %98 : vector<8x384xf32>
    %100 = vector.extract_strided_slice %99 {offsets = [0, 0], sizes = [8, 128], strides = [1, 1]} : vector<8x384xf32> to vector<8x128xf32>
    %101 = vector.extract_strided_slice %99 {offsets = [0, 128], sizes = [8, 128], strides = [1, 1]} : vector<8x384xf32> to vector<8x128xf32>
    %102 = vector.extract_strided_slice %99 {offsets = [0, 256], sizes = [8, 128], strides = [1, 1]} : vector<8x384xf32> to vector<8x128xf32>
    %103 = vector.extract_strided_slice %91 {offsets = [0, 384], sizes = [8, 128], strides = [1, 1]} : vector<8x512xf32> to vector<8x128xf32>
    %104 = math.tanh %103 : vector<8x128xf32>
    %105 = arith.mulf %101, %83 : vector<8x128xf32>
    %106 = arith.mulf %100, %104 : vector<8x128xf32>
    %107 = arith.addf %105, %106 : vector<8x128xf32>
    %108 = math.tanh %107 : vector<8x128xf32>
    %109 = arith.mulf %102, %108 : vector<8x128xf32>
    %c4_i32 = arith.constant 4 : i32
    %110 = arith.index_cast %c4_i32 : i32 to index
    %c0_36 = arith.constant 0 : index
    %c0_37 = arith.constant 0 : index
    %111 = vector.load %arg7[%110, %c0_36, %c0_37] : memref<8x8x512xf32, #tpu.memory_space<vmem>>, vector<1x8x512xf32>
    %112 = vector.shape_cast %111 : vector<1x8x512xf32> to vector<8x512xf32>
    %113 = arith.truncf %109 : vector<8x128xf32> to vector<8x128xbf16>
    %cst_38 = arith.constant dense<0.000000e+00> : vector<8x512xf32>
    %114 = tpu.matmul %113, %11, %cst_38 {dimension_numbers = #tpu.dot_dimension_numbers<[1], [0], [0], [1], [0, 0, 1, 1], [], []>} : vector<8x128xbf16>, vector<128x512xbf16>, vector<8x512xf32> -> vector<8x512xf32>
    %115 = arith.addf %112, %114 : vector<8x512xf32>
    %116 = vector.extract_strided_slice %115 {offsets = [0, 0], sizes = [8, 384], strides = [1, 1]} : vector<8x512xf32> to vector<8x384xf32>
    %cst_39 = arith.constant 5.000000e-01 : f32
    %117 = vector.broadcast %cst_39 : f32 to vector<8x384xf32>
    %118 = arith.mulf %117, %116 : vector<8x384xf32>
    %119 = math.tanh %118 : vector<8x384xf32>
    %cst_40 = arith.constant 5.000000e-01 : f32
    %120 = vector.broadcast %cst_40 : f32 to vector<8x384xf32>
    %121 = arith.mulf %120, %119 : vector<8x384xf32>
    %cst_41 = arith.constant 5.000000e-01 : f32
    %122 = vector.broadcast %cst_41 : f32 to vector<8x384xf32>
    %123 = arith.addf %121, %122 : vector<8x384xf32>
    %124 = vector.extract_strided_slice %123 {offsets = [0, 0], sizes = [8, 128], strides = [1, 1]} : vector<8x384xf32> to vector<8x128xf32>
    %125 = vector.extract_strided_slice %123 {offsets = [0, 128], sizes = [8, 128], strides = [1, 1]} : vector<8x384xf32> to vector<8x128xf32>
    %126 = vector.extract_strided_slice %123 {offsets = [0, 256], sizes = [8, 128], strides = [1, 1]} : vector<8x384xf32> to vector<8x128xf32>
    %127 = vector.extract_strided_slice %115 {offsets = [0, 384], sizes = [8, 128], strides = [1, 1]} : vector<8x512xf32> to vector<8x128xf32>
    %128 = math.tanh %127 : vector<8x128xf32>
    %129 = arith.mulf %125, %107 : vector<8x128xf32>
    %130 = arith.mulf %124, %128 : vector<8x128xf32>
    %131 = arith.addf %129, %130 : vector<8x128xf32>
    %132 = math.tanh %131 : vector<8x128xf32>
    %133 = arith.mulf %126, %132 : vector<8x128xf32>
    %c5_i32 = arith.constant 5 : i32
    %134 = arith.index_cast %c5_i32 : i32 to index
    %c0_42 = arith.constant 0 : index
    %c0_43 = arith.constant 0 : index
    %135 = vector.load %arg7[%134, %c0_42, %c0_43] : memref<8x8x512xf32, #tpu.memory_space<vmem>>, vector<1x8x512xf32>
    %136 = vector.shape_cast %135 : vector<1x8x512xf32> to vector<8x512xf32>
    %137 = arith.truncf %133 : vector<8x128xf32> to vector<8x128xbf16>
    %cst_44 = arith.constant dense<0.000000e+00> : vector<8x512xf32>
    %138 = tpu.matmul %137, %11, %cst_44 {dimension_numbers = #tpu.dot_dimension_numbers<[1], [0], [0], [1], [0, 0, 1, 1], [], []>} : vector<8x128xbf16>, vector<128x512xbf16>, vector<8x512xf32> -> vector<8x512xf32>
    %139 = arith.addf %136, %138 : vector<8x512xf32>
    %140 = vector.extract_strided_slice %139 {offsets = [0, 0], sizes = [8, 384], strides = [1, 1]} : vector<8x512xf32> to vector<8x384xf32>
    %cst_45 = arith.constant 5.000000e-01 : f32
    %141 = vector.broadcast %cst_45 : f32 to vector<8x384xf32>
    %142 = arith.mulf %141, %140 : vector<8x384xf32>
    %143 = math.tanh %142 : vector<8x384xf32>
    %cst_46 = arith.constant 5.000000e-01 : f32
    %144 = vector.broadcast %cst_46 : f32 to vector<8x384xf32>
    %145 = arith.mulf %144, %143 : vector<8x384xf32>
    %cst_47 = arith.constant 5.000000e-01 : f32
    %146 = vector.broadcast %cst_47 : f32 to vector<8x384xf32>
    %147 = arith.addf %145, %146 : vector<8x384xf32>
    %148 = vector.extract_strided_slice %147 {offsets = [0, 0], sizes = [8, 128], strides = [1, 1]} : vector<8x384xf32> to vector<8x128xf32>
    %149 = vector.extract_strided_slice %147 {offsets = [0, 128], sizes = [8, 128], strides = [1, 1]} : vector<8x384xf32> to vector<8x128xf32>
    %150 = vector.extract_strided_slice %147 {offsets = [0, 256], sizes = [8, 128], strides = [1, 1]} : vector<8x384xf32> to vector<8x128xf32>
    %151 = vector.extract_strided_slice %139 {offsets = [0, 384], sizes = [8, 128], strides = [1, 1]} : vector<8x512xf32> to vector<8x128xf32>
    %152 = math.tanh %151 : vector<8x128xf32>
    %153 = arith.mulf %149, %131 : vector<8x128xf32>
    %154 = arith.mulf %148, %152 : vector<8x128xf32>
    %155 = arith.addf %153, %154 : vector<8x128xf32>
    %156 = math.tanh %155 : vector<8x128xf32>
    %157 = arith.mulf %150, %156 : vector<8x128xf32>
    %c6_i32 = arith.constant 6 : i32
    %158 = arith.index_cast %c6_i32 : i32 to index
    %c0_48 = arith.constant 0 : index
    %c0_49 = arith.constant 0 : index
    %159 = vector.load %arg7[%158, %c0_48, %c0_49] : memref<8x8x512xf32, #tpu.memory_space<vmem>>, vector<1x8x512xf32>
    %160 = vector.shape_cast %159 : vector<1x8x512xf32> to vector<8x512xf32>
    %161 = arith.truncf %157 : vector<8x128xf32> to vector<8x128xbf16>
    %cst_50 = arith.constant dense<0.000000e+00> : vector<8x512xf32>
    %162 = tpu.matmul %161, %11, %cst_50 {dimension_numbers = #tpu.dot_dimension_numbers<[1], [0], [0], [1], [0, 0, 1, 1], [], []>} : vector<8x128xbf16>, vector<128x512xbf16>, vector<8x512xf32> -> vector<8x512xf32>
    %163 = arith.addf %160, %162 : vector<8x512xf32>
    %164 = vector.extract_strided_slice %163 {offsets = [0, 0], sizes = [8, 384], strides = [1, 1]} : vector<8x512xf32> to vector<8x384xf32>
    %cst_51 = arith.constant 5.000000e-01 : f32
    %165 = vector.broadcast %cst_51 : f32 to vector<8x384xf32>
    %166 = arith.mulf %165, %164 : vector<8x384xf32>
    %167 = math.tanh %166 : vector<8x384xf32>
    %cst_52 = arith.constant 5.000000e-01 : f32
    %168 = vector.broadcast %cst_52 : f32 to vector<8x384xf32>
    %169 = arith.mulf %168, %167 : vector<8x384xf32>
    %cst_53 = arith.constant 5.000000e-01 : f32
    %170 = vector.broadcast %cst_53 : f32 to vector<8x384xf32>
    %171 = arith.addf %169, %170 : vector<8x384xf32>
    %172 = vector.extract_strided_slice %171 {offsets = [0, 0], sizes = [8, 128], strides = [1, 1]} : vector<8x384xf32> to vector<8x128xf32>
    %173 = vector.extract_strided_slice %171 {offsets = [0, 128], sizes = [8, 128], strides = [1, 1]} : vector<8x384xf32> to vector<8x128xf32>
    %174 = vector.extract_strided_slice %171 {offsets = [0, 256], sizes = [8, 128], strides = [1, 1]} : vector<8x384xf32> to vector<8x128xf32>
    %175 = vector.extract_strided_slice %163 {offsets = [0, 384], sizes = [8, 128], strides = [1, 1]} : vector<8x512xf32> to vector<8x128xf32>
    %176 = math.tanh %175 : vector<8x128xf32>
    %177 = arith.mulf %173, %155 : vector<8x128xf32>
    %178 = arith.mulf %172, %176 : vector<8x128xf32>
    %179 = arith.addf %177, %178 : vector<8x128xf32>
    %180 = math.tanh %179 : vector<8x128xf32>
    %181 = arith.mulf %174, %180 : vector<8x128xf32>
    %c7_i32 = arith.constant 7 : i32
    %182 = arith.index_cast %c7_i32 : i32 to index
    %c0_54 = arith.constant 0 : index
    %c0_55 = arith.constant 0 : index
    %183 = vector.load %arg7[%182, %c0_54, %c0_55] : memref<8x8x512xf32, #tpu.memory_space<vmem>>, vector<1x8x512xf32>
    %184 = vector.shape_cast %183 : vector<1x8x512xf32> to vector<8x512xf32>
    %185 = arith.truncf %181 : vector<8x128xf32> to vector<8x128xbf16>
    %cst_56 = arith.constant dense<0.000000e+00> : vector<8x512xf32>
    %186 = tpu.matmul %185, %11, %cst_56 {dimension_numbers = #tpu.dot_dimension_numbers<[1], [0], [0], [1], [0, 0, 1, 1], [], []>} : vector<8x128xbf16>, vector<128x512xbf16>, vector<8x512xf32> -> vector<8x512xf32>
    %187 = arith.addf %184, %186 : vector<8x512xf32>
    %188 = vector.extract_strided_slice %187 {offsets = [0, 0], sizes = [8, 384], strides = [1, 1]} : vector<8x512xf32> to vector<8x384xf32>
    %cst_57 = arith.constant 5.000000e-01 : f32
    %189 = vector.broadcast %cst_57 : f32 to vector<8x384xf32>
    %190 = arith.mulf %189, %188 : vector<8x384xf32>
    %191 = math.tanh %190 : vector<8x384xf32>
    %cst_58 = arith.constant 5.000000e-01 : f32
    %192 = vector.broadcast %cst_58 : f32 to vector<8x384xf32>
    %193 = arith.mulf %192, %191 : vector<8x384xf32>
    %cst_59 = arith.constant 5.000000e-01 : f32
    %194 = vector.broadcast %cst_59 : f32 to vector<8x384xf32>
    %195 = arith.addf %193, %194 : vector<8x384xf32>
    %196 = vector.extract_strided_slice %195 {offsets = [0, 0], sizes = [8, 128], strides = [1, 1]} : vector<8x384xf32> to vector<8x128xf32>
    %197 = vector.extract_strided_slice %195 {offsets = [0, 128], sizes = [8, 128], strides = [1, 1]} : vector<8x384xf32> to vector<8x128xf32>
    %198 = vector.extract_strided_slice %195 {offsets = [0, 256], sizes = [8, 128], strides = [1, 1]} : vector<8x384xf32> to vector<8x128xf32>
    %199 = vector.extract_strided_slice %187 {offsets = [0, 384], sizes = [8, 128], strides = [1, 1]} : vector<8x512xf32> to vector<8x128xf32>
    %200 = math.tanh %199 : vector<8x128xf32>
    %201 = arith.mulf %197, %179 : vector<8x128xf32>
    %202 = arith.mulf %196, %200 : vector<8x128xf32>
    %203 = arith.addf %201, %202 : vector<8x128xf32>
    %204 = math.tanh %203 : vector<8x128xf32>
    %205 = arith.mulf %198, %204 : vector<8x128xf32>
    %c8_i32 = arith.constant 8 : i32
    %c0_60 = arith.constant 0 : index
    %c0_61 = arith.constant 0 : index
    %206 = vector.load %arg4[%c0_60, %c0_61] : memref<128x128xf32, #tpu.memory_space<vmem>>, vector<128x128xf32>
    %cst_62 = arith.constant dense<0.000000e+00> : vector<8x128xf32>
    %207 = tpu.matmul %205, %206, %cst_62 {dimension_numbers = #tpu.dot_dimension_numbers<[1], [0], [0], [1], [0, 0, 1, 1], [], []>} : vector<8x128xf32>, vector<128x128xf32>, vector<8x128xf32> -> vector<8x128xf32>
    %c0_63 = arith.constant 0 : index
    %c0_64 = arith.constant 0 : index
    %208 = vector.load %arg5[%c0_63, %c0_64] : memref<1x128xf32, #tpu.memory_space<vmem>>, vector<1x128xf32>
    %209 = vector.broadcast %208 : vector<1x128xf32> to vector<8x128xf32>
    %210 = arith.addf %207, %209 : vector<8x128xf32>
    %c0_65 = arith.constant 0 : index
    %c0_66 = arith.constant 0 : index
    %211 = vector.load %arg6[%c0_65, %c0_66] : memref<8x128xf32, #tpu.memory_space<vmem>>, vector<8x128xf32>
    tpu.vector_store %arg6[%c0_65, %c0_66], %210 {strides = array<i32>} : memref<8x128xf32, #tpu.memory_space<vmem>>, vector<8x128xf32>,
    return
  }
}

</mosaic_0001>

<llo_original>
// kernel: tpu_custom_call.1
$region0: #{tpu_custom_call.1}
  #allocation0 [shape = 'u32[]', space=smem, size = 0x4, offset = 0x4, fixed_abs, tag = 'smem constant byte address 0x4 - core index']
  #allocation1 [shape = 'u32[72,128]{1,0:T(1,128)}', space=vmem, size = 0x9000, scoped, tag = 'internal scratch']
  #allocation2 [shape = 'f32[8,8,512]{2,1,0:T(8,128)}', space=vmem, size = 0x20000, scoped, tag = 'scratch operand']
  %s0 = inlined_call_operand.vmem [shape: f32[8,8,1], index: 0, kind: input, shape index: {}]
  %s1 = inlined_call_operand.vmem [shape: f32[1,512], index: 1, kind: input, shape index: {}]
  %s2 = inlined_call_operand.hbm [shape: bf16[128,512], index: 2, kind: input, shape index: {}]
  %s3 = inlined_call_operand.vmem [shape: f32[1,512], index: 3, kind: input, shape index: {}]
  %s4 = inlined_call_operand.hbm [shape: f32[128,128], index: 4, kind: input, shape index: {}]
  %s5 = inlined_call_operand.vmem [shape: f32[1,128], index: 5, kind: input, shape index: {}]
  %s6 = inlined_call_operand.hbm [shape: f32[8,128], index: 6, kind: output, shape index: {}]
  %s7 = sld [smem:[#allocation0]]
  $region42: #{tpu_custom_call.1} parent=0
    _
  %s9 = ssub.s32 1, %s7
  %s10 = scalar_select 0, %s9, %s7
  $region1: #{tpu_custom_call.1} parent=0
    #allocation3 [shape = 'u8[131072]{0}', space=vmem, size = 0x20000, scoped, tag = 'input window, operand 2, single buffered']
    #allocation4 [shape = 's32[1]{0}', space=sflag, size = 0x4, scoped, tag = 'scoped memory for tpu_custom_call.1']
    #allocation5 [shape = 's32[1]{0}', space=sflag, size = 0x4, scoped, tag = 'scoped memory for tpu_custom_call.1']
    #allocation6 [shape = 'u8[65536]{0}', space=vmem, size = 0x10000, scoped, tag = 'input window, operand 4, single buffered']
    #allocation7 [shape = 's32[1]{0}', space=sflag, size = 0x4, scoped, tag = 'scoped memory for tpu_custom_call.1']
    #allocation8 [shape = 'u8[4096]{0}', space=vmem, size = 0x1000, scoped, tag = 'output window, operand 0, single buffered']
    %11 = vsyncpa [#allocation4], 0
    %12 = vsyncpa [#allocation7], 0
    %13 = vsyncpa [#allocation5], 0
    // Predicated region
    $region2: #{tpu_custom_call.1} parent=1 // pred_check
      _
    $region3: #{tpu_custom_call.1} parent=1 // pred_check_branch
      %15 = sbr.rel (0) target = $region5
    $region4: #{tpu_custom_call.1} parent=1 // pred_region
      _
    $region5: #{tpu_custom_call.1} parent=1 // pred_fallthru
      _
    // Predicated region
    $region6: #{tpu_custom_call.1} parent=1 // pred_check
      _
    $region7: #{tpu_custom_call.1} parent=1 // pred_check_branch
      %17 = sbr.rel (0) target = $region9
    $region8: #{tpu_custom_call.1} parent=1 // pred_region
      _
    $region9: #{tpu_custom_call.1} parent=1 // pred_fallthru
      _
    // Predicated region
    $region10: #{tpu_custom_call.1} parent=1 // pred_check
      _
    $region11: #{tpu_custom_call.1} parent=1 // pred_check_branch
      %19 = sbr.rel (0) target = $region13
    $region12: #{tpu_custom_call.1} parent=1 // pred_region
      %21 = vsyncadd [#allocation4], 0
      %s22 = sshll.u32 %s2, 4
      %s23 = int_to_ptr.hbm [resolvable:$true] %s22
      %s24 = sshll.u32 [#allocation3], 4
      %s25 = int_to_ptr.vmem [resolvable:$true] %s24
      %30 = dma.hbm_to_vmem [thread:$0]  %s23, 4096, %s25, [#allocation4], 256, 256, 16
    $region13: #{tpu_custom_call.1} parent=1 // pred_fallthru
      _
    // Predicated region
    $region14: #{tpu_custom_call.1} parent=1 // pred_check
      _
    $region15: #{tpu_custom_call.1} parent=1 // pred_check_branch
      %32 = sbr.rel (0) target = $region17
    $region16: #{tpu_custom_call.1} parent=1 // pred_region
      _
    $region17: #{tpu_custom_call.1} parent=1 // pred_fallthru
      _
    // Predicated region
    $region18: #{tpu_custom_call.1} parent=1 // pred_check
      _
    $region19: #{tpu_custom_call.1} parent=1 // pred_check_branch
      %34 = sbr.rel (0) target = $region21
    $region20: #{tpu_custom_call.1} parent=1 // pred_region
      %36 = vsyncadd [#allocation7], 0
      %s37 = sshll.u32 %s4, 4
      %s38 = int_to_ptr.hbm [resolvable:$true] %s37
      %s39 = sshll.u32 [#allocation6], 4
      %s40 = int_to_ptr.vmem [resolvable:$true] %s39
      %45 = dma.hbm_to_vmem [thread:$0]  %s38, 2048, %s40, [#allocation7], 128, 128, 8
    $region21: #{tpu_custom_call.1} parent=1 // pred_fallthru
      _
    // Predicated region
    $region22: #{tpu_custom_call.1} parent=1 // pred_check
      _
    $region23: #{tpu_custom_call.1} parent=1 // pred_check_branch
      %47 = sbr.rel (0) target = $region25
    $region24: #{tpu_custom_call.1} parent=1 // pred_region
      _
    $region25: #{tpu_custom_call.1} parent=1 // pred_fallthru
      _
    // Predicated region
    $region26: #{tpu_custom_call.1} parent=1 // pred_check
      _
    $region27: #{tpu_custom_call.1} parent=1 // pred_check_branch
      %49 = sbr.rel (0) target = $region29
    $region28: #{tpu_custom_call.1} parent=1 // pred_region
      %51 = dma.done [#allocation4], 4096
    $region29: #{tpu_custom_call.1} parent=1 // pred_fallthru
      _
    // Predicated region
    $region30: #{tpu_custom_call.1} parent=1 // pred_check
      _
    $region31: #{tpu_custom_call.1} parent=1 // pred_check_branch
      %53 = sbr.rel (0) target = $region33
    $region32: #{tpu_custom_call.1} parent=1 // pred_region
      %55 = dma.done [#allocation7], 2048
    $region33: #{tpu_custom_call.1} parent=1 // pred_fallthru
      _
    %v57 = vld [vmem:[%s0] sm:$0xff]
    %v58 = vld [vmem:[%s0 + $0x8] sm:$0xff]
    %v59 = vld [vmem:[%s0 + $0x10] sm:$0xff]
    %v60 = vld [vmem:[%s0 + $0x18] sm:$0xff]
    %v61 = vld [vmem:[%s0 + $0x20] sm:$0xff]
    %v62 = vld [vmem:[%s0 + $0x28] sm:$0xff]
    %v63 = vld [vmem:[%s0 + $0x30] sm:$0xff]
    %v64 = vld [vmem:[%s0 + $0x38] sm:$0xff]
    %v65 = vld [vmem:[%s1] sm:$0xf]
    %67 = vset.pattern.permute.xlu0 0
    %68 = vperm.xlu0 %67, %v57
    %v69 = vpop.permute.xlu0 %68
    %72 = vset.pattern.permute.xlu0 0
    %73 = vperm.xlu0 %72, %v58
    %v74 = vpop.permute.xlu0 %73
    %77 = vset.pattern.permute.xlu0 0
    %78 = vperm.xlu0 %77, %v59
    %v79 = vpop.permute.xlu0 %78
    %82 = vset.pattern.permute.xlu0 0
    %83 = vperm.xlu0 %82, %v60
    %v84 = vpop.permute.xlu0 %83
    %87 = vset.pattern.permute.xlu0 0
    %88 = vperm.xlu0 %87, %v61
    %v89 = vpop.permute.xlu0 %88
    %92 = vset.pattern.permute.xlu0 0
    %93 = vperm.xlu0 %92, %v62
    %v94 = vpop.permute.xlu0 %93
    %97 = vset.pattern.permute.xlu0 0
    %98 = vperm.xlu0 %97, %v63
    %v99 = vpop.permute.xlu0 %98
    %102 = vset.pattern.permute.xlu0 0
    %103 = vperm.xlu0 %102, %v64
    %v104 = vpop.permute.xlu0 %103
    %v107 = vperm.slane %v65, 0
    %v108 = vperm.slane %v65, 1
    %v109 = vperm.slane %v65, 2
    %v110 = vperm.slane %v65, 3
    %v115 = vmul.f32 %v69, %v107
    %v116 = vmul.f32 %v69, %v108
    %v117 = vmul.f32 %v69, %v109
    %v118 = vmul.f32 %v69, %v110
    %v119 = vmul.f32 %v74, %v107
    %v120 = vmul.f32 %v74, %v108
    %v121 = vmul.f32 %v74, %v109
    %v122 = vmul.f32 %v74, %v110
    %v123 = vmul.f32 %v79, %v107
    %v124 = vmul.f32 %v79, %v108
    %v125 = vmul.f32 %v79, %v109
    %v126 = vmul.f32 %v79, %v110
    %v127 = vmul.f32 %v84, %v107
    %v128 = vmul.f32 %v84, %v108
    %v129 = vmul.f32 %v84, %v109
    %v130 = vmul.f32 %v84, %v110
    %v131 = vmul.f32 %v89, %v107
    %v132 = vmul.f32 %v89, %v108
    %v133 = vmul.f32 %v89, %v109
    %v134 = vmul.f32 %v89, %v110
    %v135 = vmul.f32 %v94, %v107
    %v136 = vmul.f32 %v94, %v108
    %v137 = vmul.f32 %v94, %v109
    %v138 = vmul.f32 %v94, %v110
    %v139 = vmul.f32 %v99, %v107
    %v140 = vmul.f32 %v99, %v108
    %v141 = vmul.f32 %v99, %v109
    %v142 = vmul.f32 %v99, %v110
    %v143 = vmul.f32 %v104, %v107
    %v144 = vmul.f32 %v104, %v108
    %v145 = vmul.f32 %v104, %v109
    %v146 = vmul.f32 %v104, %v110
    %v147 = vld [vmem:[%s3] sm:$0xf]
    %v149 = vperm.slane %v147, 0
    %v150 = vperm.slane %v147, 1
    %v151 = vperm.slane %v147, 2
    %v152 = vperm.slane %v147, 3
    %v157 = vadd.f32 %v115, %v149
    %v158 = vadd.f32 %v116, %v150
    %v159 = vadd.f32 %v117, %v151
    %v160 = vadd.f32 %v118, %v152
    %v161 = vadd.f32 %v119, %v149
    %v162 = vadd.f32 %v120, %v150
    %v163 = vadd.f32 %v121, %v151
    %v164 = vadd.f32 %v122, %v152
    %v165 = vadd.f32 %v123, %v149
    %v166 = vadd.f32 %v124, %v150
    %v167 = vadd.f32 %v125, %v151
    %v168 = vadd.f32 %v126, %v152
    %v169 = vadd.f32 %v127, %v149
    %v170 = vadd.f32 %v128, %v150
    %v171 = vadd.f32 %v129, %v151
    %v172 = vadd.f32 %v130, %v152
    %v173 = vadd.f32 %v131, %v149
    %v174 = vadd.f32 %v132, %v150
    %v175 = vadd.f32 %v133, %v151
    %v176 = vadd.f32 %v134, %v152
    %v177 = vadd.f32 %v135, %v149
    %v178 = vadd.f32 %v136, %v150
    %v179 = vadd.f32 %v137, %v151
    %v180 = vadd.f32 %v138, %v152
    %v181 = vadd.f32 %v139, %v149
    %v182 = vadd.f32 %v140, %v150
    %v183 = vadd.f32 %v141, %v151
    %v184 = vadd.f32 %v142, %v152
    %v185 = vadd.f32 %v143, %v149
    %v186 = vadd.f32 %v144, %v150
    %v187 = vadd.f32 %v145, %v151
    %v188 = vadd.f32 %v146, %v152
    %189 = vst [vmem:[#allocation2] sm:$0xff] %v157
    %190 = vst [vmem:[#allocation2 + $0x8] sm:$0xff] %v158
    %191 = vst [vmem:[#allocation2 + $0x10] sm:$0xff] %v159
    %192 = vst [vmem:[#allocation2 + $0x18] sm:$0xff] %v160
    %193 = vst [vmem:[#allocation2 + $0x20] sm:$0xff] %v161
    %194 = vst [vmem:[#allocation2 + $0x28] sm:$0xff] %v162
    %195 = vst [vmem:[#allocation2 + $0x30] sm:$0xff] %v163
    %196 = vst [vmem:[#allocation2 + $0x38] sm:$0xff] %v164
    %197 = vst [vmem:[#allocation2 + $0x40] sm:$0xff] %v165
    %198 = vst [vmem:[#allocation2 + $0x48] sm:$0xff] %v166
    %199 = vst [vmem:[#allocation2 + $0x50] sm:$0xff] %v167
    %200 = vst [vmem:[#allocation2 + $0x58] sm:$0xff] %v168
    %201 = vst [vmem:[#allocation2 + $0x60] sm:$0xff] %v169
    %202 = vst [vmem:[#allocation2 + $0x68] sm:$0xff] %v170
    %203 = vst [vmem:[#allocation2 + $0x70] sm:$0xff] %v171
    %204 = vst [vmem:[#allocation2 + $0x78] sm:$0xff] %v172
    %205 = vst [vmem:[#allocation2 + $0x80] sm:$0xff] %v173
    %206 = vst [vmem:[#allocation2 + $0x88] sm:$0xff] %v174
    %207 = vst [vmem:[#allocation2 + $0x90] sm:$0xff] %v175
    %208 = vst [vmem:[#allocation2 + $0x98] sm:$0xff] %v176
    %209 = vst [vmem:[#allocation2 + $0xa0] sm:$0xff] %v177
    %210 = vst [vmem:[#allocation2 + $0xa8] sm:$0xff] %v178
    %211 = vst [vmem:[#allocation2 + $0xb0] sm:$0xff] %v179
    %212 = vst [vmem:[#allocation2 + $0xb8] sm:$0xff] %v180
    %213 = vst [vmem:[#allocation2 + $0xc0] sm:$0xff] %v181
    %214 = vst [vmem:[#allocation2 + $0xc8] sm:$0xff] %v182
    %215 = vst [vmem:[#allocation2 + $0xd0] sm:$0xff] %v183
    %216 = vst [vmem:[#allocation2 + $0xd8] sm:$0xff] %v184
    %217 = vst [vmem:[#allocation2 + $0xe0] sm:$0xff] %v185
    %218 = vst [vmem:[#allocation2 + $0xe8] sm:$0xff] %v186
    %219 = vst [vmem:[#allocation2 + $0xf0] sm:$0xff] %v187
    %220 = vst [vmem:[#allocation2 + $0xf8] sm:$0xff] %v188
    %v221 = vld [vmem:[#allocation3] sm:$0xff]
    %v222 = vld [vmem:[#allocation3 + $0x8] sm:$0xff]
    %v223 = vld [vmem:[#allocation3 + $0x10] sm:$0xff]
    %v224 = vld [vmem:[#allocation3 + $0x18] sm:$0xff]
    %v225 = vld [vmem:[#allocation3 + $0x20] sm:$0xff]
    %v226 = vld [vmem:[#allocation3 + $0x28] sm:$0xff]
    %v227 = vld [vmem:[#allocation3 + $0x30] sm:$0xff]
    %v228 = vld [vmem:[#allocation3 + $0x38] sm:$0xff]
    %v229 = vld [vmem:[#allocation3 + $0x40] sm:$0xff]
    %v230 = vld [vmem:[#allocation3 + $0x48] sm:$0xff]
    %v231 = vld [vmem:[#allocation3 + $0x50] sm:$0xff]
    %v232 = vld [vmem:[#allocation3 + $0x58] sm:$0xff]
    %v233 = vld [vmem:[#allocation3 + $0x60] sm:$0xff]
    %v234 = vld [vmem:[#allocation3 + $0x68] sm:$0xff]
    %v235 = vld [vmem:[#allocation3 + $0x70] sm:$0xff]
    %v236 = vld [vmem:[#allocation3 + $0x78] sm:$0xff]
    %v237 = vld [vmem:[#allocation3 + $0x80] sm:$0xff]
    %v238 = vld [vmem:[#allocation3 + $0x88] sm:$0xff]
    %v239 = vld [vmem:[#allocation3 + $0x90] sm:$0xff]
    %v240 = vld [vmem:[#allocation3 + $0x98] sm:$0xff]
    %v241 = vld [vmem:[#allocation3 + $0xa0] sm:$0xff]
    %v242 = vld [vmem:[#allocation3 + $0xa8] sm:$0xff]
    %v243 = vld [vmem:[#allocation3 + $0xb0] sm:$0xff]
    %v244 = vld [vmem:[#allocation3 + $0xb8] sm:$0xff]
    %v245 = vld [vmem:[#allocation3 + $0xc0] sm:$0xff]
    %v246 = vld [vmem:[#allocation3 + $0xc8] sm:$0xff]
    %v247 = vld [vmem:[#allocation3 + $0xd0] sm:$0xff]
    %v248 = vld [vmem:[#allocation3 + $0xd8] sm:$0xff]
    %v249 = vld [vmem:[#allocation3 + $0xe0] sm:$0xff]
    %v250 = vld [vmem:[#allocation3 + $0xe8] sm:$0xff]
    %v251 = vld [vmem:[#allocation3 + $0xf0] sm:$0xff]
    %v252 = vld [vmem:[#allocation3 + $0xf8] sm:$0xff]
    %v253 = vld [vmem:[#allocation2] sm:$0xff]
    %v254 = vld [vmem:[#allocation2 + $0x8] sm:$0xff]
    %v255 = vld [vmem:[#allocation2 + $0x10] sm:$0xff]
    %v256 = vld [vmem:[#allocation2 + $0x18] sm:$0xff]
    %v289 = vunpack.c.l.b16 %v221
    %v290 = vunpack.c.h.b16 %v221
    %v291 = vunpack.c.l.b16 %v222
    %v292 = vunpack.c.h.b16 %v222
    %v293 = vunpack.c.l.b16 %v223
    %v294 = vunpack.c.h.b16 %v223
    %v295 = vunpack.c.l.b16 %v224
    %v296 = vunpack.c.h.b16 %v224
    %v297 = vunpack.c.l.b16 %v225
    %v298 = vunpack.c.h.b16 %v225
    %v299 = vunpack.c.l.b16 %v226
    %v300 = vunpack.c.h.b16 %v226
    %v301 = vunpack.c.l.b16 %v227
    %v302 = vunpack.c.h.b16 %v227
    %v303 = vunpack.c.l.b16 %v228
    %v304 = vunpack.c.h.b16 %v228
    %v305 = vunpack.c.l.b16 %v229
    %v306 = vunpack.c.h.b16 %v229
    %v307 = vunpack.c.l.b16 %v230
    %v308 = vunpack.c.h.b16 %v230
    %v309 = vunpack.c.l.b16 %v231
    %v310 = vunpack.c.h.b16 %v231
    %v311 = vunpack.c.l.b16 %v232
    %v312 = vunpack.c.h.b16 %v232
    %v313 = vunpack.c.l.b16 %v233
    %v314 = vunpack.c.h.b16 %v233
    %v315 = vunpack.c.l.b16 %v234
    %v316 = vunpack.c.h.b16 %v234
    %v317 = vunpack.c.l.b16 %v235
    %v318 = vunpack.c.h.b16 %v235
    %v319 = vunpack.c.l.b16 %v236
    %v320 = vunpack.c.h.b16 %v236
    %v321 = vunpack.c.l.b16 %v237
    %v322 = vunpack.c.h.b16 %v237
    %v323 = vunpack.c.l.b16 %v238
    %v324 = vunpack.c.h.b16 %v238
    %v325 = vunpack.c.l.b16 %v239
    %v326 = vunpack.c.h.b16 %v239
    %v327 = vunpack.c.l.b16 %v240
    %v328 = vunpack.c.h.b16 %v240
    %v329 = vunpack.c.l.b16 %v241
    %v330 = vunpack.c.h.b16 %v241
    %v331 = vunpack.c.l.b16 %v242
    %v332 = vunpack.c.h.b16 %v242
    %v333 = vunpack.c.l.b16 %v243
    %v334 = vunpack.c.h.b16 %v243
    %v335 = vunpack.c.l.b16 %v244
    %v336 = vunpack.c.h.b16 %v244
    %v337 = vunpack.c.l.b16 %v245
    %v338 = vunpack.c.h.b16 %v245
    %v339 = vunpack.c.l.b16 %v246
    %v340 = vunpack.c.h.b16 %v246
    %v341 = vunpack.c.l.b16 %v247
    %v342 = vunpack.c.h.b16 %v247
    %v343 = vunpack.c.l.b16 %v248
    %v344 = vunpack.c.h.b16 %v248
    %v345 = vunpack.c.l.b16 %v249
    %v346 = vunpack.c.h.b16 %v249
    %v347 = vunpack.c.l.b16 %v250
    %v348 = vunpack.c.h.b16 %v250
    %v349 = vunpack.c.l.b16 %v251
    %v350 = vunpack.c.h.b16 %v251
    %v351 = vunpack.c.l.b16 %v252
    %v352 = vunpack.c.h.b16 %v252
    %v353 = vpack.c.b16 %v293, %v289
    %v354 = vpack.c.b16 %v294, %v290
    %v355 = vpack.c.b16 %v295, %v291
    %v356 = vpack.c.b16 %v296, %v292
    %v357 = vpack.c.b16 %v301, %v297
    %v358 = vpack.c.b16 %v302, %v298
    %v359 = vpack.c.b16 %v303, %v299
    %v360 = vpack.c.b16 %v304, %v300
    %v361 = vpack.c.b16 %v309, %v305
    %v362 = vpack.c.b16 %v310, %v306
    %v363 = vpack.c.b16 %v311, %v307
    %v364 = vpack.c.b16 %v312, %v308
    %v365 = vpack.c.b16 %v317, %v313
    %v366 = vpack.c.b16 %v318, %v314
    %v367 = vpack.c.b16 %v319, %v315
    %v368 = vpack.c.b16 %v320, %v316
    %v369 = vpack.c.b16 %v325, %v321
    %v370 = vpack.c.b16 %v326, %v322
    %v371 = vpack.c.b16 %v327, %v323
    %v372 = vpack.c.b16 %v328, %v324
    %v373 = vpack.c.b16 %v333, %v329
    %v374 = vpack.c.b16 %v334, %v330
    %v375 = vpack.c.b16 %v335, %v331
    %v376 = vpack.c.b16 %v336, %v332
    %v377 = vpack.c.b16 %v341, %v337
    %v378 = vpack.c.b16 %v342, %v338
    %v379 = vpack.c.b16 %v343, %v339
    %v380 = vpack.c.b16 %v344, %v340
    %v381 = vpack.c.b16 %v349, %v345
    %v382 = vpack.c.b16 %v350, %v346
    %v383 = vpack.c.b16 %v351, %v347
    %v384 = vpack.c.b16 %v352, %v348
    %417 = vmatpush.bf16.msra.mxu0 %v381
    %418 = vmatpush.bf16.msra.mxu0 %v377
    %419 = vmatpush.bf16.msra.mxu0 %v373
    %420 = vmatpush.bf16.msra.mxu0 %v369
    %421 = vmatpush.bf16.msra.mxu0 %v365
    %422 = vmatpush.bf16.msra.mxu0 %v361
    %423 = vmatpush.bf16.msra.mxu0 %v357
    %424 = vmatpush.bf16.msra.mxu0 %v353
    %425 = vmatmul.bf16.gmra.mxu0 0
    %v426 = vpop.f32.mrf.mxu0
    %v427 = vadd.f32 0.0, %v426
    %v428 = vpop.f32.mrf.mxu0
    %429 = vdwg.mxu0
    %430 = vmatpush.bf16.msra.mxu0 %v382
    %431 = vmatpush.bf16.msra.mxu0 %v378
    %432 = vmatpush.bf16.msra.mxu0 %v374
    %433 = vmatpush.bf16.msra.mxu0 %v370
    %434 = vmatpush.bf16.msra.mxu0 %v366
    %435 = vmatpush.bf16.msra.mxu0 %v362
    %436 = vmatpush.bf16.msra.mxu0 %v358
    %437 = vmatpush.bf16.msra.mxu0 %v354
    %438 = vmatmul.bf16.gmra.mxu0 0
    %v439 = vpop.f32.mrf.mxu0
    %v440 = vadd.f32 0.0, %v439
    %v441 = vpop.f32.mrf.mxu0
    %442 = vdwg.mxu0
    %443 = vmatpush.bf16.msra.mxu0 %v383
    %444 = vmatpush.bf16.msra.mxu0 %v379
    %445 = vmatpush.bf16.msra.mxu0 %v375
    %446 = vmatpush.bf16.msra.mxu0 %v371
    %447 = vmatpush.bf16.msra.mxu0 %v367
    %448 = vmatpush.bf16.msra.mxu0 %v363
    %449 = vmatpush.bf16.msra.mxu0 %v359
    %450 = vmatpush.bf16.msra.mxu0 %v355
    %451 = vmatmul.bf16.gmra.mxu0 0
    %v452 = vpop.f32.mrf.mxu0
    %v453 = vadd.f32 0.0, %v452
    %v454 = vpop.f32.mrf.mxu0
    %455 = vdwg.mxu0
    %456 = vmatpush.bf16.msra.mxu0 %v384
    %457 = vmatpush.bf16.msra.mxu0 %v380
    %458 = vmatpush.bf16.msra.mxu0 %v376
    %459 = vmatpush.bf16.msra.mxu0 %v372
    %460 = vmatpush.bf16.msra.mxu0 %v368
    %461 = vmatpush.bf16.msra.mxu0 %v364
    %462 = vmatpush.bf16.msra.mxu0 %v360
    %463 = vmatpush.bf16.msra.mxu0 %v356
    %464 = vmatmul.bf16.gmra.mxu0 0
    %v465 = vpop.f32.mrf.mxu0
    %v466 = vadd.f32 0.0, %v465
    %v467 = vpop.f32.mrf.mxu0
    %468 = vdwg.mxu0
    %v469 = vadd.f32 %v253, %v427
    %v470 = vadd.f32 %v254, %v440
    %v471 = vadd.f32 %v255, %v453
    %v472 = vadd.f32 %v256, %v466
    %v473 = vmul.f32 %v469, 0.5
    %v474 = vmul.f32 %v470, 0.5
    %v475 = vmul.f32 %v471, 0.5
    %v476 = vtanh.pop %v473
    %v477 = vtanh.pop %v474
    %v478 = vtanh.pop %v475
    %v479 = vmul.f32 %v476, 0.5
    %v480 = vmul.f32 %v477, 0.5
    %v481 = vmul.f32 %v478, 0.5
    %v482 = vadd.f32 %v479, 0.5
    %v483 = vadd.f32 %v480, 0.5
    %v484 = vadd.f32 %v481, 0.5
    %v485 = vtanh.pop %v472
    %v486 = vmul.f32 %v483, 0.0
    %v487 = vmul.f32 %v482, %v485
    %v488 = vadd.f32 %v486, %v487
    %v489 = vtanh.pop %v488
    %v490 = vmul.f32 %v484, %v489
    %s491 = scalar_lea.vmem [#allocation2], 32
    %v492 = vld [vmem:[%s491] sm:$0xff]
    %v493 = vld [vmem:[%s491 + $0x8] sm:$0xff]
    %v494 = vld [vmem:[%s491 + $0x10] sm:$0xff]
    %v495 = vld [vmem:[%s491 + $0x18] sm:$0xff]
    %v496 = vpack.c.bf16 %v490, %v490
    %497 = vmatpush.bf16.msra.mxu0 %v381
    %498 = vmatpush.bf16.msra.mxu0 %v377
    %499 = vmatpush.bf16.msra.mxu0 %v373
    %500 = vmatpush.bf16.msra.mxu0 %v369
    %501 = vmatpush.bf16.msra.mxu0 %v365
    %502 = vmatpush.bf16.msra.mxu0 %v361
    %503 = vmatpush.bf16.msra.mxu0 %v357
    %504 = vmatpush.bf16.msra.mxu0 %v353
    %505 = vmatmul.bf16.gmra.mxu0 %v496
    %v506 = vpop.f32.mrf.mxu0
    %v507 = vadd.f32 0.0, %v506
    %v508 = vpop.f32.mrf.mxu0
    %509 = vdwg.mxu0
    %510 = vmatpush.bf16.msra.mxu0 %v382
    %511 = vmatpush.bf16.msra.mxu0 %v378
    %512 = vmatpush.bf16.msra.mxu0 %v374
    %513 = vmatpush.bf16.msra.mxu0 %v370
    %514 = vmatpush.bf16.msra.mxu0 %v366
    %515 = vmatpush.bf16.msra.mxu0 %v362
    %516 = vmatpush.bf16.msra.mxu0 %v358
    %517 = vmatpush.bf16.msra.mxu0 %v354
    %518 = vmatmul.bf16.gmra.mxu0 %v496
    %v519 = vpop.f32.mrf.mxu0
    %v520 = vadd.f32 0.0, %v519
    %v521 = vpop.f32.mrf.mxu0
    %522 = vdwg.mxu0
    %523 = vmatpush.bf16.msra.mxu0 %v383
    %524 = vmatpush.bf16.msra.mxu0 %v379
    %525 = vmatpush.bf16.msra.mxu0 %v375
    %526 = vmatpush.bf16.msra.mxu0 %v371
    %527 = vmatpush.bf16.msra.mxu0 %v367
    %528 = vmatpush.bf16.msra.mxu0 %v363
    %529 = vmatpush.bf16.msra.mxu0 %v359
    %530 = vmatpush.bf16.msra.mxu0 %v355
    %531 = vmatmul.bf16.gmra.mxu0 %v496
    %v532 = vpop.f32.mrf.mxu0
    %v533 = vadd.f32 0.0, %v532
    %v534 = vpop.f32.mrf.mxu0
    %535 = vdwg.mxu0
    %536 = vmatpush.bf16.msra.mxu0 %v384
    %537 = vmatpush.bf16.msra.mxu0 %v380
    %538 = vmatpush.bf16.msra.mxu0 %v376
    %539 = vmatpush.bf16.msra.mxu0 %v372
    %540 = vmatpush.bf16.msra.mxu0 %v368
    %541 = vmatpush.bf16.msra.mxu0 %v364
    %542 = vmatpush.bf16.msra.mxu0 %v360
    %543 = vmatpush.bf16.msra.mxu0 %v356
    %544 = vmatmul.bf16.gmra.mxu0 %v496
    %v545 = vpop.f32.mrf.mxu0
    %v546 = vadd.f32 0.0, %v545
    %v547 = vpop.f32.mrf.mxu0
    %548 = vdwg.mxu0
    %v549 = vadd.f32 %v492, %v507
    %v550 = vadd.f32 %v493, %v520
    %v551 = vadd.f32 %v494, %v533
    %v552 = vadd.f32 %v495, %v546
    %v553 = vmul.f32 %v549, 0.5
    %v554 = vmul.f32 %v550, 0.5
    %v555 = vmul.f32 %v551, 0.5
    %v556 = vtanh.pop %v553
    %v557 = vtanh.pop %v554
    %v558 = vtanh.pop %v555
    %v559 = vmul.f32 %v556, 0.5
    %v560 = vmul.f32 %v557, 0.5
    %v561 = vmul.f32 %v558, 0.5
    %v562 = vadd.f32 %v559, 0.5
    %v563 = vadd.f32 %v560, 0.5
    %v564 = vadd.f32 %v561, 0.5
    %v565 = vtanh.pop %v552
    %v566 = vmul.f32 %v563, %v488
    %v567 = vmul.f32 %v562, %v565
    %v568 = vadd.f32 %v566, %v567
    %v569 = vtanh.pop %v568
    %v570 = vmul.f32 %v564, %v569
    %s571 = scalar_lea.vmem [#allocation2], 64
    %v572 = vld [vmem:[%s571] sm:$0xff]
    %v573 = vld [vmem:[%s571 + $0x8] sm:$0xff]
    %v574 = vld [vmem:[%s571 + $0x10] sm:$0xff]
    %v575 = vld [vmem:[%s571 + $0x18] sm:$0xff]
    %v576 = vpack.c.bf16 %v570, %v570
    %577 = vmatpush.bf16.msra.mxu0 %v381
    %578 = vmatpush.bf16.msra.mxu0 %v377
    %579 = vmatpush.bf16.msra.mxu0 %v373
    %580 = vmatpush.bf16.msra.mxu0 %v369
    %581 = vmatpush.bf16.msra.mxu0 %v365
    %582 = vmatpush.bf16.msra.mxu0 %v361
    %583 = vmatpush.bf16.msra.mxu0 %v357
    %584 = vmatpush.bf16.msra.mxu0 %v353
    %585 = vmatmul.bf16.gmra.mxu0 %v576
    %v586 = vpop.f32.mrf.mxu0
    %v587 = vadd.f32 0.0, %v586
    %v588 = vpop.f32.mrf.mxu0
    %589 = vdwg.mxu0
    %590 = vmatpush.bf16.msra.mxu0 %v382
    %591 = vmatpush.bf16.msra.mxu0 %v378
    %592 = vmatpush.bf16.msra.mxu0 %v374
    %593 = vmatpush.bf16.msra.mxu0 %v370
    %594 = vmatpush.bf16.msra.mxu0 %v366
    %595 = vmatpush.bf16.msra.mxu0 %v362
    %596 = vmatpush.bf16.msra.mxu0 %v358
    %597 = vmatpush.bf16.msra.mxu0 %v354
    %598 = vmatmul.bf16.gmra.mxu0 %v576
    %v599 = vpop.f32.mrf.mxu0
    %v600 = vadd.f32 0.0, %v599
    %v601 = vpop.f32.mrf.mxu0
    %602 = vdwg.mxu0
    %603 = vmatpush.bf16.msra.mxu0 %v383
    %604 = vmatpush.bf16.msra.mxu0 %v379
    %605 = vmatpush.bf16.msra.mxu0 %v375
    %606 = vmatpush.bf16.msra.mxu0 %v371
    %607 = vmatpush.bf16.msra.mxu0 %v367
    %608 = vmatpush.bf16.msra.mxu0 %v363
    %609 = vmatpush.bf16.msra.mxu0 %v359
    %610 = vmatpush.bf16.msra.mxu0 %v355
    %611 = vmatmul.bf16.gmra.mxu0 %v576
    %v612 = vpop.f32.mrf.mxu0
    %v613 = vadd.f32 0.0, %v612
    %v614 = vpop.f32.mrf.mxu0
    %615 = vdwg.mxu0
    %616 = vmatpush.bf16.msra.mxu0 %v384
    %617 = vmatpush.bf16.msra.mxu0 %v380
    %618 = vmatpush.bf16.msra.mxu0 %v376
    %619 = vmatpush.bf16.msra.mxu0 %v372
    %620 = vmatpush.bf16.msra.mxu0 %v368
    %621 = vmatpush.bf16.msra.mxu0 %v364
    %622 = vmatpush.bf16.msra.mxu0 %v360
    %623 = vmatpush.bf16.msra.mxu0 %v356
    %624 = vmatmul.bf16.gmra.mxu0 %v576
    %v625 = vpop.f32.mrf.mxu0
    %v626 = vadd.f32 0.0, %v625
    %v627 = vpop.f32.mrf.mxu0
    %628 = vdwg.mxu0
    %v629 = vadd.f32 %v572, %v587
    %v630 = vadd.f32 %v573, %v600
    %v631 = vadd.f32 %v574, %v613
    %v632 = vadd.f32 %v575, %v626
    %v633 = vmul.f32 %v629, 0.5
    %v634 = vmul.f32 %v630, 0.5
    %v635 = vmul.f32 %v631, 0.5
    %v636 = vtanh.pop %v633
    %v637 = vtanh.pop %v634
    %v638 = vtanh.pop %v635
    %v639 = vmul.f32 %v636, 0.5
    %v640 = vmul.f32 %v637, 0.5
    %v641 = vmul.f32 %v638, 0.5
    %v642 = vadd.f32 %v639, 0.5
    %v643 = vadd.f32 %v640, 0.5
    %v644 = vadd.f32 %v641, 0.5
    %v645 = vtanh.pop %v632
    %v646 = vmul.f32 %v643, %v568
    %v647 = vmul.f32 %v642, %v645
    %v648 = vadd.f32 %v646, %v647
    %v649 = vtanh.pop %v648
    %v650 = vmul.f32 %v644, %v649
    %s651 = scalar_lea.vmem [#allocation2], 96
    %v652 = vld [vmem:[%s651] sm:$0xff]
    %v653 = vld [vmem:[%s651 + $0x8] sm:$0xff]
    %v654 = vld [vmem:[%s651 + $0x10] sm:$0xff]
    %v655 = vld [vmem:[%s651 + $0x18] sm:$0xff]
    %v656 = vpack.c.bf16 %v650, %v650
    %657 = vmatpush.bf16.msra.mxu0 %v381
    %658 = vmatpush.bf16.msra.mxu0 %v377
    %659 = vmatpush.bf16.msra.mxu0 %v373
    %660 = vmatpush.bf16.msra.mxu0 %v369
    %661 = vmatpush.bf16.msra.mxu0 %v365
    %662 = vmatpush.bf16.msra.mxu0 %v361
    %663 = vmatpush.bf16.msra.mxu0 %v357
    %664 = vmatpush.bf16.msra.mxu0 %v353
    %665 = vmatmul.bf16.gmra.mxu0 %v656
    %v666 = vpop.f32.mrf.mxu0
    %v667 = vadd.f32 0.0, %v666
    %v668 = vpop.f32.mrf.mxu0
    %669 = vdwg.mxu0
    %670 = vmatpush.bf16.msra.mxu0 %v382
    %671 = vmatpush.bf16.msra.mxu0 %v378
    %672 = vmatpush.bf16.msra.mxu0 %v374
    %673 = vmatpush.bf16.msra.mxu0 %v370
    %674 = vmatpush.bf16.msra.mxu0 %v366
    %675 = vmatpush.bf16.msra.mxu0 %v362
    %676 = vmatpush.bf16.msra.mxu0 %v358
    %677 = vmatpush.bf16.msra.mxu0 %v354
    %678 = vmatmul.bf16.gmra.mxu0 %v656
    %v679 = vpop.f32.mrf.mxu0
    %v680 = vadd.f32 0.0, %v679
    %v681 = vpop.f32.mrf.mxu0
    %682 = vdwg.mxu0
    %683 = vmatpush.bf16.msra.mxu0 %v383
    %684 = vmatpush.bf16.msra.mxu0 %v379
    %685 = vmatpush.bf16.msra.mxu0 %v375
    %686 = vmatpush.bf16.msra.mxu0 %v371
    %687 = vmatpush.bf16.msra.mxu0 %v367
    %688 = vmatpush.bf16.msra.mxu0 %v363
    %689 = vmatpush.bf16.msra.mxu0 %v359
    %690 = vmatpush.bf16.msra.mxu0 %v355
    %691 = vmatmul.bf16.gmra.mxu0 %v656
    %v692 = vpop.f32.mrf.mxu0
    %v693 = vadd.f32 0.0, %v692
    %v694 = vpop.f32.mrf.mxu0
    %695 = vdwg.mxu0
    %696 = vmatpush.bf16.msra.mxu0 %v384
    %697 = vmatpush.bf16.msra.mxu0 %v380
    %698 = vmatpush.bf16.msra.mxu0 %v376
    %699 = vmatpush.bf16.msra.mxu0 %v372
    %700 = vmatpush.bf16.msra.mxu0 %v368
    %701 = vmatpush.bf16.msra.mxu0 %v364
    %702 = vmatpush.bf16.msra.mxu0 %v360
    %703 = vmatpush.bf16.msra.mxu0 %v356
    %704 = vmatmul.bf16.gmra.mxu0 %v656
    %v705 = vpop.f32.mrf.mxu0
    %v706 = vadd.f32 0.0, %v705
    %v707 = vpop.f32.mrf.mxu0
    %708 = vdwg.mxu0
    %v709 = vadd.f32 %v652, %v667
    %v710 = vadd.f32 %v653, %v680
    %v711 = vadd.f32 %v654, %v693
    %v712 = vadd.f32 %v655, %v706
    %v713 = vmul.f32 %v709, 0.5
    %v714 = vmul.f32 %v710, 0.5
    %v715 = vmul.f32 %v711, 0.5
    %v716 = vtanh.pop %v713
    %v717 = vtanh.pop %v714
    %v718 = vtanh.pop %v715
    %v719 = vmul.f32 %v716, 0.5
    %v720 = vmul.f32 %v717, 0.5
    %v721 = vmul.f32 %v718, 0.5
    %v722 = vadd.f32 %v719, 0.5
    %v723 = vadd.f32 %v720, 0.5
    %v724 = vadd.f32 %v721, 0.5
    %v725 = vtanh.pop %v712
    %v726 = vmul.f32 %v723, %v648
    %v727 = vmul.f32 %v722, %v725
    %v728 = vadd.f32 %v726, %v727
    %v729 = vtanh.pop %v728
    %v730 = vmul.f32 %v724, %v729
    %s731 = scalar_lea.vmem [#allocation2], 128
    %v732 = vld [vmem:[%s731] sm:$0xff]
    %v733 = vld [vmem:[%s731 + $0x8] sm:$0xff]
    %v734 = vld [vmem:[%s731 + $0x10] sm:$0xff]
    %v735 = vld [vmem:[%s731 + $0x18] sm:$0xff]
    %v736 = vpack.c.bf16 %v730, %v730
    %737 = vmatpush.bf16.msra.mxu0 %v381
    %738 = vmatpush.bf16.msra.mxu0 %v377
    %739 = vmatpush.bf16.msra.mxu0 %v373
    %740 = vmatpush.bf16.msra.mxu0 %v369
    %741 = vmatpush.bf16.msra.mxu0 %v365
    %742 = vmatpush.bf16.msra.mxu0 %v361
    %743 = vmatpush.bf16.msra.mxu0 %v357
    %744 = vmatpush.bf16.msra.mxu0 %v353
    %745 = vmatmul.bf16.gmra.mxu0 %v736
    %v746 = vpop.f32.mrf.mxu0
    %v747 = vadd.f32 0.0, %v746
    %v748 = vpop.f32.mrf.mxu0
    %749 = vdwg.mxu0
    %750 = vmatpush.bf16.msra.mxu0 %v382
    %751 = vmatpush.bf16.msra.mxu0 %v378
    %752 = vmatpush.bf16.msra.mxu0 %v374
    %753 = vmatpush.bf16.msra.mxu0 %v370
    %754 = vmatpush.bf16.msra.mxu0 %v366
    %755 = vmatpush.bf16.msra.mxu0 %v362
    %756 = vmatpush.bf16.msra.mxu0 %v358
    %757 = vmatpush.bf16.msra.mxu0 %v354
    %758 = vmatmul.bf16.gmra.mxu0 %v736
    %v759 = vpop.f32.mrf.mxu0
    %v760 = vadd.f32 0.0, %v759
    %v761 = vpop.f32.mrf.mxu0
    %762 = vdwg.mxu0
    %763 = vmatpush.bf16.msra.mxu0 %v383
    %764 = vmatpush.bf16.msra.mxu0 %v379
    %765 = vmatpush.bf16.msra.mxu0 %v375
    %766 = vmatpush.bf16.msra.mxu0 %v371
    %767 = vmatpush.bf16.msra.mxu0 %v367
    %768 = vmatpush.bf16.msra.mxu0 %v363
    %769 = vmatpush.bf16.msra.mxu0 %v359
    %770 = vmatpush.bf16.msra.mxu0 %v355
    %771 = vmatmul.bf16.gmra.mxu0 %v736
    %v772 = vpop.f32.mrf.mxu0
    %v773 = vadd.f32 0.0, %v772
    %v774 = vpop.f32.mrf.mxu0
    %775 = vdwg.mxu0
    %776 = vmatpush.bf16.msra.mxu0 %v384
    %777 = vmatpush.bf16.msra.mxu0 %v380
    %778 = vmatpush.bf16.msra.mxu0 %v376
    %779 = vmatpush.bf16.msra.mxu0 %v372
    %780 = vmatpush.bf16.msra.mxu0 %v368
    %781 = vmatpush.bf16.msra.mxu0 %v364
    %782 = vmatpush.bf16.msra.mxu0 %v360
    %783 = vmatpush.bf16.msra.mxu0 %v356
    %784 = vmatmul.bf16.gmra.mxu0 %v736
    %v785 = vpop.f32.mrf.mxu0
    %v786 = vadd.f32 0.0, %v785
    %v787 = vpop.f32.mrf.mxu0
    %788 = vdwg.mxu0
    %v789 = vadd.f32 %v732, %v747
    %v790 = vadd.f32 %v733, %v760
    %v791 = vadd.f32 %v734, %v773
    %v792 = vadd.f32 %v735, %v786
    %v793 = vmul.f32 %v789, 0.5
    %v794 = vmul.f32 %v790, 0.5
    %v795 = vmul.f32 %v791, 0.5
    %v796 = vtanh.pop %v793
    %v797 = vtanh.pop %v794
    %v798 = vtanh.pop %v795
    %v799 = vmul.f32 %v796, 0.5
    %v800 = vmul.f32 %v797, 0.5
    %v801 = vmul.f32 %v798, 0.5
    %v802 = vadd.f32 %v799, 0.5
    %v803 = vadd.f32 %v800, 0.5
    %v804 = vadd.f32 %v801, 0.5
    %v805 = vtanh.pop %v792
    %v806 = vmul.f32 %v803, %v728
    %v807 = vmul.f32 %v802, %v805
    %v808 = vadd.f32 %v806, %v807
    %v809 = vtanh.pop %v808
    %v810 = vmul.f32 %v804, %v809
    %s811 = scalar_lea.vmem [#allocation2], 160
    %v812 = vld [vmem:[%s811] sm:$0xff]
    %v813 = vld [vmem:[%s811 + $0x8] sm:$0xff]
    %v814 = vld [vmem:[%s811 + $0x10] sm:$0xff]
    %v815 = vld [vmem:[%s811 + $0x18] sm:$0xff]
    %v816 = vpack.c.bf16 %v810, %v810
    %817 = vmatpush.bf16.msra.mxu0 %v381
    %818 = vmatpush.bf16.msra.mxu0 %v377
    %819 = vmatpush.bf16.msra.mxu0 %v373
    %820 = vmatpush.bf16.msra.mxu0 %v369
    %821 = vmatpush.bf16.msra.mxu0 %v365
    %822 = vmatpush.bf16.msra.mxu0 %v361
    %823 = vmatpush.bf16.msra.mxu0 %v357
    %824 = vmatpush.bf16.msra.mxu0 %v353
    %825 = vmatmul.bf16.gmra.mxu0 %v816
    %v826 = vpop.f32.mrf.mxu0
    %v827 = vadd.f32 0.0, %v826
    %v828 = vpop.f32.mrf.mxu0
    %829 = vdwg.mxu0
    %830 = vmatpush.bf16.msra.mxu0 %v382
    %831 = vmatpush.bf16.msra.mxu0 %v378
    %832 = vmatpush.bf16.msra.mxu0 %v374
    %833 = vmatpush.bf16.msra.mxu0 %v370
    %834 = vmatpush.bf16.msra.mxu0 %v366
    %835 = vmatpush.bf16.msra.mxu0 %v362
    %836 = vmatpush.bf16.msra.mxu0 %v358
    %837 = vmatpush.bf16.msra.mxu0 %v354
    %838 = vmatmul.bf16.gmra.mxu0 %v816
    %v839 = vpop.f32.mrf.mxu0
    %v840 = vadd.f32 0.0, %v839
    %v841 = vpop.f32.mrf.mxu0
    %842 = vdwg.mxu0
    %843 = vmatpush.bf16.msra.mxu0 %v383
    %844 = vmatpush.bf16.msra.mxu0 %v379
    %845 = vmatpush.bf16.msra.mxu0 %v375
    %846 = vmatpush.bf16.msra.mxu0 %v371
    %847 = vmatpush.bf16.msra.mxu0 %v367
    %848 = vmatpush.bf16.msra.mxu0 %v363
    %849 = vmatpush.bf16.msra.mxu0 %v359
    %850 = vmatpush.bf16.msra.mxu0 %v355
    %851 = vmatmul.bf16.gmra.mxu0 %v816
    %v852 = vpop.f32.mrf.mxu0
    %v853 = vadd.f32 0.0, %v852
    %v854 = vpop.f32.mrf.mxu0
    %855 = vdwg.mxu0
    %856 = vmatpush.bf16.msra.mxu0 %v384
    %857 = vmatpush.bf16.msra.mxu0 %v380
    %858 = vmatpush.bf16.msra.mxu0 %v376
    %859 = vmatpush.bf16.msra.mxu0 %v372
    %860 = vmatpush.bf16.msra.mxu0 %v368
    %861 = vmatpush.bf16.msra.mxu0 %v364
    %862 = vmatpush.bf16.msra.mxu0 %v360
    %863 = vmatpush.bf16.msra.mxu0 %v356
    %864 = vmatmul.bf16.gmra.mxu0 %v816
    %v865 = vpop.f32.mrf.mxu0
    %v866 = vadd.f32 0.0, %v865
    %v867 = vpop.f32.mrf.mxu0
    %868 = vdwg.mxu0
    %v869 = vadd.f32 %v812, %v827
    %v870 = vadd.f32 %v813, %v840
    %v871 = vadd.f32 %v814, %v853
    %v872 = vadd.f32 %v815, %v866
    %v873 = vmul.f32 %v869, 0.5
    %v874 = vmul.f32 %v870, 0.5
    %v875 = vmul.f32 %v871, 0.5
    %v876 = vtanh.pop %v873
    %v877 = vtanh.pop %v874
    %v878 = vtanh.pop %v875
    %v879 = vmul.f32 %v876, 0.5
    %v880 = vmul.f32 %v877, 0.5
    %v881 = vmul.f32 %v878, 0.5
    %v882 = vadd.f32 %v879, 0.5
    %v883 = vadd.f32 %v880, 0.5
    %v884 = vadd.f32 %v881, 0.5
    %v885 = vtanh.pop %v872
    %v886 = vmul.f32 %v883, %v808
    %v887 = vmul.f32 %v882, %v885
    %v888 = vadd.f32 %v886, %v887
    %v889 = vtanh.pop %v888
    %v890 = vmul.f32 %v884, %v889
    %s891 = scalar_lea.vmem [#allocation2], 192
    %v892 = vld [vmem:[%s891] sm:$0xff]
    %v893 = vld [vmem:[%s891 + $0x8] sm:$0xff]
    %v894 = vld [vmem:[%s891 + $0x10] sm:$0xff]
    %v895 = vld [vmem:[%s891 + $0x18] sm:$0xff]
    %v896 = vpack.c.bf16 %v890, %v890
    %897 = vmatpush.bf16.msra.mxu0 %v381
    %898 = vmatpush.bf16.msra.mxu0 %v377
    %899 = vmatpush.bf16.msra.mxu0 %v373
    %900 = vmatpush.bf16.msra.mxu0 %v369
    %901 = vmatpush.bf16.msra.mxu0 %v365
    %902 = vmatpush.bf16.msra.mxu0 %v361
    %903 = vmatpush.bf16.msra.mxu0 %v357
    %904 = vmatpush.bf16.msra.mxu0 %v353
    %905 = vmatmul.bf16.gmra.mxu0 %v896
    %v906 = vpop.f32.mrf.mxu0
    %v907 = vadd.f32 0.0, %v906
    %v908 = vpop.f32.mrf.mxu0
    %909 = vdwg.mxu0
    %910 = vmatpush.bf16.msra.mxu0 %v382
    %911 = vmatpush.bf16.msra.mxu0 %v378
    %912 = vmatpush.bf16.msra.mxu0 %v374
    %913 = vmatpush.bf16.msra.mxu0 %v370
    %914 = vmatpush.bf16.msra.mxu0 %v366
    %915 = vmatpush.bf16.msra.mxu0 %v362
    %916 = vmatpush.bf16.msra.mxu0 %v358
    %917 = vmatpush.bf16.msra.mxu0 %v354
    %918 = vmatmul.bf16.gmra.mxu0 %v896
    %v919 = vpop.f32.mrf.mxu0
    %v920 = vadd.f32 0.0, %v919
    %v921 = vpop.f32.mrf.mxu0
    %922 = vdwg.mxu0
    %923 = vmatpush.bf16.msra.mxu0 %v383
    %924 = vmatpush.bf16.msra.mxu0 %v379
    %925 = vmatpush.bf16.msra.mxu0 %v375
    %926 = vmatpush.bf16.msra.mxu0 %v371
    %927 = vmatpush.bf16.msra.mxu0 %v367
    %928 = vmatpush.bf16.msra.mxu0 %v363
    %929 = vmatpush.bf16.msra.mxu0 %v359
    %930 = vmatpush.bf16.msra.mxu0 %v355
    %931 = vmatmul.bf16.gmra.mxu0 %v896
    %v932 = vpop.f32.mrf.mxu0
    %v933 = vadd.f32 0.0, %v932
    %v934 = vpop.f32.mrf.mxu0
    %935 = vdwg.mxu0
    %936 = vmatpush.bf16.msra.mxu0 %v384
    %937 = vmatpush.bf16.msra.mxu0 %v380
    %938 = vmatpush.bf16.msra.mxu0 %v376
    %939 = vmatpush.bf16.msra.mxu0 %v372
    %940 = vmatpush.bf16.msra.mxu0 %v368
    %941 = vmatpush.bf16.msra.mxu0 %v364
    %942 = vmatpush.bf16.msra.mxu0 %v360
    %943 = vmatpush.bf16.msra.mxu0 %v356
    %944 = vmatmul.bf16.gmra.mxu0 %v896
    %v945 = vpop.f32.mrf.mxu0
    %v946 = vadd.f32 0.0, %v945
    %v947 = vpop.f32.mrf.mxu0
    %948 = vdwg.mxu0
    %v949 = vadd.f32 %v892, %v907
    %v950 = vadd.f32 %v893, %v920
    %v951 = vadd.f32 %v894, %v933
    %v952 = vadd.f32 %v895, %v946
    %v953 = vmul.f32 %v949, 0.5
    %v954 = vmul.f32 %v950, 0.5
    %v955 = vmul.f32 %v951, 0.5
    %v956 = vtanh.pop %v953
    %v957 = vtanh.pop %v954
    %v958 = vtanh.pop %v955
    %v959 = vmul.f32 %v956, 0.5
    %v960 = vmul.f32 %v957, 0.5
    %v961 = vmul.f32 %v958, 0.5
    %v962 = vadd.f32 %v959, 0.5
    %v963 = vadd.f32 %v960, 0.5
    %v964 = vadd.f32 %v961, 0.5
    %v965 = vtanh.pop %v952
    %v966 = vmul.f32 %v963, %v888
    %v967 = vmul.f32 %v962, %v965
    %v968 = vadd.f32 %v966, %v967
    %v969 = vtanh.pop %v968
    %v970 = vmul.f32 %v964, %v969
    %s971 = scalar_lea.vmem [#allocation2], 224
    %v972 = vld [vmem:[%s971] sm:$0xff]
    %v973 = vld [vmem:[%s971 + $0x8] sm:$0xff]
    %v974 = vld [vmem:[%s971 + $0x10] sm:$0xff]
    %v975 = vld [vmem:[%s971 + $0x18] sm:$0xff]
    %v976 = vpack.c.bf16 %v970, %v970
    %977 = vmatpush.bf16.msra.mxu0 %v381
    %978 = vmatpush.bf16.msra.mxu0 %v377
    %979 = vmatpush.bf16.msra.mxu0 %v373
    %980 = vmatpush.bf16.msra.mxu0 %v369
    %981 = vmatpush.bf16.msra.mxu0 %v365
    %982 = vmatpush.bf16.msra.mxu0 %v361
    %983 = vmatpush.bf16.msra.mxu0 %v357
    %984 = vmatpush.bf16.msra.mxu0 %v353
    %985 = vmatmul.bf16.gmra.mxu0 %v976
    %v986 = vpop.f32.mrf.mxu0
    %v987 = vadd.f32 0.0, %v986
    %v988 = vpop.f32.mrf.mxu0
    %989 = vdwg.mxu0
    %990 = vmatpush.bf16.msra.mxu0 %v382
    %991 = vmatpush.bf16.msra.mxu0 %v378
    %992 = vmatpush.bf16.msra.mxu0 %v374
    %993 = vmatpush.bf16.msra.mxu0 %v370
    %994 = vmatpush.bf16.msra.mxu0 %v366
    %995 = vmatpush.bf16.msra.mxu0 %v362
    %996 = vmatpush.bf16.msra.mxu0 %v358
    %997 = vmatpush.bf16.msra.mxu0 %v354
    %998 = vmatmul.bf16.gmra.mxu0 %v976
    %v999 = vpop.f32.mrf.mxu0
    %v1000 = vadd.f32 0.0, %v999
    %v1001 = vpop.f32.mrf.mxu0
    %1002 = vdwg.mxu0
    %1003 = vmatpush.bf16.msra.mxu0 %v383
    %1004 = vmatpush.bf16.msra.mxu0 %v379
    %1005 = vmatpush.bf16.msra.mxu0 %v375
    %1006 = vmatpush.bf16.msra.mxu0 %v371
    %1007 = vmatpush.bf16.msra.mxu0 %v367
    %1008 = vmatpush.bf16.msra.mxu0 %v363
    %1009 = vmatpush.bf16.msra.mxu0 %v359
    %1010 = vmatpush.bf16.msra.mxu0 %v355
    %1011 = vmatmul.bf16.gmra.mxu0 %v976
    %v1012 = vpop.f32.mrf.mxu0
    %v1013 = vadd.f32 0.0, %v1012
    %v1014 = vpop.f32.mrf.mxu0
    %1015 = vdwg.mxu0
    %1016 = vmatpush.bf16.msra.mxu0 %v384
    %1017 = vmatpush.bf16.msra.mxu0 %v380
    %1018 = vmatpush.bf16.msra.mxu0 %v376
    %1019 = vmatpush.bf16.msra.mxu0 %v372
    %1020 = vmatpush.bf16.msra.mxu0 %v368
    %1021 = vmatpush.bf16.msra.mxu0 %v364
    %1022 = vmatpush.bf16.msra.mxu0 %v360
    %1023 = vmatpush.bf16.msra.mxu0 %v356
    %1024 = vmatmul.bf16.gmra.mxu0 %v976
    %v1025 = vpop.f32.mrf.mxu0
    %v1026 = vadd.f32 0.0, %v1025
    %v1027 = vpop.f32.mrf.mxu0
    %1028 = vdwg.mxu0
    %v1029 = vadd.f32 %v972, %v987
    %v1030 = vadd.f32 %v973, %v1000
    %v1031 = vadd.f32 %v974, %v1013
    %v1032 = vadd.f32 %v975, %v1026
    %v1033 = vmul.f32 %v1029, 0.5
    %v1034 = vmul.f32 %v1030, 0.5
    %v1035 = vmul.f32 %v1031, 0.5
    %v1036 = vtanh.pop %v1033
    %v1037 = vtanh.pop %v1034
    %v1038 = vtanh.pop %v1035
    %v1039 = vmul.f32 %v1036, 0.5
    %v1040 = vmul.f32 %v1037, 0.5
    %v1041 = vmul.f32 %v1038, 0.5
    %v1042 = vadd.f32 %v1039, 0.5
    %v1043 = vadd.f32 %v1040, 0.5
    %v1044 = vadd.f32 %v1041, 0.5
    %v1045 = vtanh.pop %v1032
    %v1046 = vmul.f32 %v1043, %v968
    %v1047 = vmul.f32 %v1042, %v1045
    %v1048 = vadd.f32 %v1046, %v1047
    %v1049 = vtanh.pop %v1048
    %v1050 = vmul.f32 %v1044, %v1049
    %v1051 = vld [vmem:[#allocation6] sm:$0xff]
    %v1052 = vld [vmem:[#allocation6 + $0x8] sm:$0xff]
    %v1053 = vld [vmem:[#allocation6 + $0x10] sm:$0xff]
    %v1054 = vld [vmem:[#allocation6 + $0x18] sm:$0xff]
    %v1055 = vld [vmem:[#allocation6 + $0x20] sm:$0xff]
    %v1056 = vld [vmem:[#allocation6 + $0x28] sm:$0xff]
    %v1057 = vld [vmem:[#allocation6 + $0x30] sm:$0xff]
    %v1058 = vld [vmem:[#allocation6 + $0x38] sm:$0xff]
    %v1059 = vld [vmem:[#allocation6 + $0x40] sm:$0xff]
    %v1060 = vld [vmem:[#allocation6 + $0x48] sm:$0xff]
    %v1061 = vld [vmem:[#allocation6 + $0x50] sm:$0xff]
    %v1062 = vld [vmem:[#allocation6 + $0x58] sm:$0xff]
    %v1063 = vld [vmem:[#allocation6 + $0x60] sm:$0xff]
    %v1064 = vld [vmem:[#allocation6 + $0x68] sm:$0xff]
    %v1065 = vld [vmem:[#allocation6 + $0x70] sm:$0xff]
    %v1066 = vld [vmem:[#allocation6 + $0x78] sm:$0xff]
    %v1067 = vld [vmem:[%s5] sm:$0x1]
    %v1069 = vperm.slane %v1067, 0
    %1071 = vmatpush.msra.mxu0 %v1066
    %1072 = vmatpush.msra.mxu0 %v1065
    %1073 = vmatpush.msra.mxu0 %v1064
    %1074 = vmatpush.msra.mxu0 %v1063
    %1075 = vmatpush.msra.mxu0 %v1062
    %1076 = vmatpush.msra.mxu0 %v1061
    %1077 = vmatpush.msra.mxu0 %v1060
    %1078 = vmatpush.msra.mxu0 %v1059
    %1079 = vmatpush.msra.mxu0 %v1058
    %1080 = vmatpush.msra.mxu0 %v1057
    %1081 = vmatpush.msra.mxu0 %v1056
    %1082 = vmatpush.msra.mxu0 %v1055
    %1083 = vmatpush.msra.mxu0 %v1054
    %1084 = vmatpush.msra.mxu0 %v1053
    %1085 = vmatpush.msra.mxu0 %v1052
    %1086 = vmatpush.msra.mxu0 %v1051
    %1087 = vmatmul.f32.gmra.mxu0 %v1050
    %v1088 = vpop.f32.mrf.mxu0
    %v1089 = vadd.f32 %v1069, %v1088
    %1090 = vdwg.mxu0
    %1091 = vst [vmem:[#allocation8] sm:$0xff] %v1089
    // Predicated region
    $region34: #{tpu_custom_call.1} parent=1 // pred_check
      _
    $region35: #{tpu_custom_call.1} parent=1 // pred_check_branch
      %1093 = sbr.rel (0) target = $region37
    $region36: #{tpu_custom_call.1} parent=1 // pred_region
      %1095 = vsyncadd [#allocation5], 0
      %s1097 = sshll.u32 [#allocation8], 4
      %s1098 = int_to_ptr.vmem [resolvable:$true] %s1097
      %s1099 = sshll.u32 %s6, 4
      %s1100 = int_to_ptr.hbm [resolvable:$true] %s1099
      %1102 = dma.vmem_to_hbm [thread:$0]  %s1098, 128, %s1100, [#allocation5]
    $region37: #{tpu_custom_call.1} parent=1 // pred_fallthru
      _
    // Predicated region
    $region38: #{tpu_custom_call.1} parent=1 // pred_check
      _
    $region39: #{tpu_custom_call.1} parent=1 // pred_check_branch
      %1104 = sbr.rel (0) target = $region41
    $region40: #{tpu_custom_call.1} parent=1 // pred_region
      %1106 = dma.done [#allocation5], 128
    $region41: #{tpu_custom_call.1} parent=1 // pred_fallthru
      _
    %1107 = vsyncpa [#allocation4], 1
    %1108 = vsyncpa [#allocation7], 1
    %1109 = vsyncpa [#allocation5], 1

</llo_original>
